<compile_context>
chip_gen: v5e
topology: v5e:2x2
jax: 0.10.0
libtpu: 0.0.40
codegen_flags: <defaults>
</compile_context>

<pallas_src>
import jax
import jax.numpy as jnp
from jax.experimental import pallas as pl
from jax.experimental.pallas import tpu as pltpu

IN_DIMS = 1
FC1_DIMS = 365
FC2_DIMS = 365
OUT_DIMS = 365
PAD = 384          # 3 * 128, lane-aligned feature width (do NOT pad to 512)
TB_MAX = 512       # batch-tile target; sweep 256/512/1024 for a given chip


def _pad2d(a, rows, cols):
    r, c = a.shape
    return jnp.pad(a, ((0, rows - r), (0, cols - c)))


def _batch_tiling(B):
    """Pick (TB, B_pad): ~TB_MAX rows per tile, grid >= 2 when possible (v7x megacore)."""
    if B <= 16:
        TB = max(8, ((B + 7) // 8) * 8)
        return TB, TB                       # tiny batch: single tile, grid=1
    half = -(-B // 2)                       # ceil(B/2) guarantees >= 2 grid steps
    TB = min(TB_MAX, ((half + 7) // 8) * 8)
    B_pad = ((B + TB - 1) // TB) * TB
    if B_pad // TB < 2:
        B_pad = 2 * TB
    return TB, B_pad


def mlp_kernel(x_ref, w1_ref, b1_ref, w2_ref, b2_ref, w3_ref, b3_ref, o_ref):
    # fc1: (TB,1) x (1,PAD) + (1,PAD).  K=1 -> a VPU broadcast multiply in f32
    # (an MXU pass would be wasted; v5e also has no bf16 VPU).
    h1 = x_ref[...] * w1_ref[...] + b1_ref[...]                     # (TB, PAD) f32
    h1 = jnp.maximum(h1, 0.0)

    # fc2: bf16 operands on the MXU, f32 accumulation, f32 bias add.
    h2 = jnp.dot(h1.astype(jnp.bfloat16), w2_ref[...],
                 preferred_element_type=jnp.float32) + b2_ref[...]
    h2 = jnp.maximum(h2, 0.0)

    # fc3 (no activation); cast to the (bf16 by default) output dtype at the store.
    out = jnp.dot(h2.astype(jnp.bfloat16), w3_ref[...],
                  preferred_element_type=jnp.float32) + b3_ref[...]
    o_ref[...] = out.astype(o_ref.dtype)


def network_forward(x, params, *, out_dtype=jnp.bfloat16, return_padded=False):
    """Fused forward pass.

    out_dtype:      dtype the kernel writes (bf16 default -> halves HBM writeback).
    return_padded:  if True, return the raw (B_pad, 384) slab and skip the
                    post-pallas slice copy (consumer must handle padding).
    """
    w1, b1, w2, b2, w3, b3 = params
    B = x.shape[0]

    # Lane-dense padding + bf16 weights (wrapper-side; zero padding is exact).
    w1p = _pad2d(w1, IN_DIMS, PAD).astype(jnp.float32)
    b1p = _pad2d(b1, 1, PAD).astype(jnp.float32)
    w2p = _pad2d(w2, PAD, PAD).astype(jnp.bfloat16)
    b2p = _pad2d(b2, 1, PAD).astype(jnp.float32)
    w3p = _pad2d(w3, PAD, PAD).astype(jnp.bfloat16)
    b3p = _pad2d(b3, 1, PAD).astype(jnp.float32)

    TB, B_pad = _batch_tiling(B)
    x_p = jnp.pad(x, ((0, B_pad - B), (0, 0)))

    # Constant index_map -> weights/biases stay resident in VMEM across grid steps.
    resident = lambda shape: pl.BlockSpec(shape, lambda i: (0, 0))

    out = pl.pallas_call(
        mlp_kernel,
        out_shape=jax.ShapeDtypeStruct((B_pad, PAD), out_dtype),
        grid=(B_pad // TB,),
        in_specs=[
            pl.BlockSpec((TB, IN_DIMS), lambda i: (i, 0)),
            resident(w1p.shape),
            resident(b1p.shape),
            resident(w2p.shape),
            resident(b2p.shape),
            resident(w3p.shape),
            resident(b3p.shape),
        ],
        out_specs=pl.BlockSpec((TB, PAD), lambda i: (i, 0)),
        compiler_params=pltpu.CompilerParams(
            dimension_semantics=("parallel",)),
    )(x_p, w1p, b1p, w2p, b2p, w3p, b3p)

    if return_padded:
        return out                      # (B_pad, PAD), no extra copy
    return out[:B, :OUT_DIMS]


def init_params(key):
    """Deterministic init mimicking nn.Linear's U(-1/sqrt(fan_in), 1/sqrt(fan_in))."""
    ks = jax.random.split(key, 6)

    def linear(kw, kb, fan_in, fan_out):
        bound = 1.0 / (fan_in ** 0.5)
        w = jax.random.uniform(kw, (fan_in, fan_out), jnp.float32, -bound, bound)
        b = jax.random.uniform(kb, (1, fan_out), jnp.float32, -bound, bound)
        return w, b

    w1, b1 = linear(ks[0], ks[1], IN_DIMS, FC1_DIMS)
    w2, b2 = linear(ks[2], ks[3], FC1_DIMS, FC2_DIMS)
    w3, b3 = linear(ks[4], ks[5], FC2_DIMS, OUT_DIMS)
    return (w1, b1, w2, b2, w3, b3)


if __name__ == "__main__":
    key = jax.random.PRNGKey(0)
    k_params, k_x = jax.random.split(key)

    params = init_params(k_params)
    B = 300  # exercises batch padding + a 2-step "parallel" grid (TB=152)
    x = jax.random.normal(k_x, (B, IN_DIMS), jnp.float32)

    out = network_forward(x, params)
    out = jax.block_until_ready(out)

    # Reference mirroring the kernel's bf16 weight/activation quantization
    # (f32 accumulation); the only extra error vs. this is the final bf16 store.
    w1, b1, w2, b2, w3, b3 = params
    w2_q = w2.astype(jnp.bfloat16)
    w3_q = w3.astype(jnp.bfloat16)
    h1 = jnp.maximum(x @ w1 + b1, 0.0)
    h2 = jnp.maximum(
        jnp.dot(h1.astype(jnp.bfloat16), w2_q, preferred_element_type=jnp.float32) + b2,
        0.0)
    ref = jnp.dot(h2.astype(jnp.bfloat16), w3_q, preferred_element_type=jnp.float32) + b3

    assert out.shape == (B, OUT_DIMS)
    err = float(jnp.max(jnp.abs(out.astype(jnp.float32) - ref)))
    assert jnp.allclose(out.astype(jnp.float32), ref, atol=3e-2, rtol=3e-2), err

    print("KERNEL_OK")
</pallas_src>

<mosaic_0001>
module attributes {stable_mosaic.version = 11 : i64} {
  func.func @mlp_kernel(%arg0: i32, %arg1: memref<152x1xf32, #tpu.memory_space<vmem>>, %arg2: memref<1x384xf32, #tpu.memory_space<vmem>>, %arg3: memref<1x384xf32, #tpu.memory_space<vmem>>, %arg4: memref<384x384xbf16, #tpu.memory_space<vmem>>, %arg5: memref<1x384xf32, #tpu.memory_space<vmem>>, %arg6: memref<384x384xbf16, #tpu.memory_space<vmem>>, %arg7: memref<1x384xf32, #tpu.memory_space<vmem>>, %arg8: memref<152x384xbf16, #tpu.memory_space<vmem>>) attributes {dimension_semantics = [#tpu.dimension_semantics<parallel>], iteration_bounds = array<i64: 2>, scalar_prefetch = 0 : i64, scratch_operands = 0 : i64, tpu.core_type = #tpu.core_type<tc>, window_params = [{transform_indices = @transform_0, window_bounds = array<i64: 152, 1>}, {pipeline_mode = #tpu.pipeline_mode<synchronous>, transform_indices = @transform_1, window_bounds = array<i64: 1, 384>}, {pipeline_mode = #tpu.pipeline_mode<synchronous>, transform_indices = @transform_2, window_bounds = array<i64: 1, 384>}, {pipeline_mode = #tpu.pipeline_mode<synchronous>, transform_indices = @transform_3, window_bounds = array<i64: 384, 384>}, {pipeline_mode = #tpu.pipeline_mode<synchronous>, transform_indices = @transform_4, window_bounds = array<i64: 1, 384>}, {pipeline_mode = #tpu.pipeline_mode<synchronous>, transform_indices = @transform_5, window_bounds = array<i64: 384, 384>}, {pipeline_mode = #tpu.pipeline_mode<synchronous>, transform_indices = @transform_6, window_bounds = array<i64: 1, 384>}, {transform_indices = @transform_7, window_bounds = array<i64: 152, 384>}]} {
    %c0 = arith.constant 0 : index
    %c0_0 = arith.constant 0 : index
    %0 = vector.load %arg1[%c0, %c0_0] : memref<152x1xf32, #tpu.memory_space<vmem>>, vector<152x1xf32>
    %c0_1 = arith.constant 0 : index
    %c0_2 = arith.constant 0 : index
    %1 = vector.load %arg2[%c0_1, %c0_2] : memref<1x384xf32, #tpu.memory_space<vmem>>, vector<1x384xf32>
    %2 = vector.broadcast %0 : vector<152x1xf32> to vector<152x384xf32>
    %3 = vector.broadcast %1 : vector<1x384xf32> to vector<152x384xf32>
    %4 = arith.mulf %2, %3 : vector<152x384xf32>
    %c0_3 = arith.constant 0 : index
    %c0_4 = arith.constant 0 : index
    %5 = vector.load %arg3[%c0_3, %c0_4] : memref<1x384xf32, #tpu.memory_space<vmem>>, vector<1x384xf32>
    %6 = vector.broadcast %5 : vector<1x384xf32> to vector<152x384xf32>
    %7 = arith.addf %4, %6 : vector<152x384xf32>
    %cst = arith.constant 0.000000e+00 : f32
    %8 = vector.broadcast %cst : f32 to vector<152x384xf32>
    %9 = arith.maximumf %7, %8 : vector<152x384xf32>
    %10 = arith.truncf %9 : vector<152x384xf32> to vector<152x384xbf16>
    %c0_5 = arith.constant 0 : index
    %c0_6 = arith.constant 0 : index
    %11 = vector.load %arg4[%c0_5, %c0_6] : memref<384x384xbf16, #tpu.memory_space<vmem>>, vector<384x384xbf16>
    %cst_7 = arith.constant dense<0.000000e+00> : vector<152x384xf32>
    %12 = tpu.matmul %10, %11, %cst_7 {dimension_numbers = #tpu.dot_dimension_numbers<[1], [0], [0], [1], [0, 0, 1, 1], [], []>} : vector<152x384xbf16>, vector<384x384xbf16>, vector<152x384xf32> -> vector<152x384xf32>
    %c0_8 = arith.constant 0 : index
    %c0_9 = arith.constant 0 : index
    %13 = vector.load %arg5[%c0_8, %c0_9] : memref<1x384xf32, #tpu.memory_space<vmem>>, vector<1x384xf32>
    %14 = vector.broadcast %13 : vector<1x384xf32> to vector<152x384xf32>
    %15 = arith.addf %12, %14 : vector<152x384xf32>
    %cst_10 = arith.constant 0.000000e+00 : f32
    %16 = vector.broadcast %cst_10 : f32 to vector<152x384xf32>
    %17 = arith.maximumf %15, %16 : vector<152x384xf32>
    %18 = arith.truncf %17 : vector<152x384xf32> to vector<152x384xbf16>
    %c0_11 = arith.constant 0 : index
    %c0_12 = arith.constant 0 : index
    %19 = vector.load %arg6[%c0_11, %c0_12] : memref<384x384xbf16, #tpu.memory_space<vmem>>, vector<384x384xbf16>
    %cst_13 = arith.constant dense<0.000000e+00> : vector<152x384xf32>
    %20 = tpu.matmul %18, %19, %cst_13 {dimension_numbers = #tpu.dot_dimension_numbers<[1], [0], [0], [1], [0, 0, 1, 1], [], []>} : vector<152x384xbf16>, vector<384x384xbf16>, vector<152x384xf32> -> vector<152x384xf32>
    %c0_14 = arith.constant 0 : index
    %c0_15 = arith.constant 0 : index
    %21 = vector.load %arg7[%c0_14, %c0_15] : memref<1x384xf32, #tpu.memory_space<vmem>>, vector<1x384xf32>
    %22 = vector.broadcast %21 : vector<1x384xf32> to vector<152x384xf32>
    %23 = arith.addf %20, %22 : vector<152x384xf32>
    %24 = arith.truncf %23 : vector<152x384xf32> to vector<152x384xbf16>
    %c0_16 = arith.constant 0 : index
    %c0_17 = arith.constant 0 : index
    %25 = vector.load %arg8[%c0_16, %c0_17] : memref<152x384xbf16, #tpu.memory_space<vmem>>, vector<152x384xbf16>
    tpu.vector_store %arg8[%c0_16, %c0_17], %24 {strides = array<i32>} : memref<152x384xbf16, #tpu.memory_space<vmem>>, vector<152x384xbf16>,
    return
  }
  func.func @transform_0(%arg0: i32) -> (i32, i32) {
    %c0_i32 = arith.constant 0 : i32
    %c0_i32_0 = arith.constant 0 : i32
    return %arg0, %c0_i32 : i32, i32
  }
  func.func @transform_1(%arg0: i32) -> (i32, i32) {
    %c0_i32 = arith.constant 0 : i32
    %c0_i32_0 = arith.constant 0 : i32
    %c0_i32_1 = arith.constant 0 : i32
    return %c0_i32, %c0_i32_0 : i32, i32
  }
  func.func @transform_2(%arg0: i32) -> (i32, i32) {
    %c0_i32 = arith.constant 0 : i32
    %c0_i32_0 = arith.constant 0 : i32
    %c0_i32_1 = arith.constant 0 : i32
    return %c0_i32, %c0_i32_0 : i32, i32
  }
  func.func @transform_3(%arg0: i32) -> (i32, i32) {
    %c0_i32 = arith.constant 0 : i32
    %c0_i32_0 = arith.constant 0 : i32
    %c0_i32_1 = arith.constant 0 : i32
    return %c0_i32, %c0_i32_0 : i32, i32
  }
  func.func @transform_4(%arg0: i32) -> (i32, i32) {
    %c0_i32 = arith.constant 0 : i32
    %c0_i32_0 = arith.constant 0 : i32
    %c0_i32_1 = arith.constant 0 : i32
    return %c0_i32, %c0_i32_0 : i32, i32
  }
  func.func @transform_5(%arg0: i32) -> (i32, i32) {
    %c0_i32 = arith.constant 0 : i32
    %c0_i32_0 = arith.constant 0 : i32
    %c0_i32_1 = arith.constant 0 : i32
    return %c0_i32, %c0_i32_0 : i32, i32
  }
  func.func @transform_6(%arg0: i32) -> (i32, i32) {
    %c0_i32 = arith.constant 0 : i32
    %c0_i32_0 = arith.constant 0 : i32
    %c0_i32_1 = arith.constant 0 : i32
    return %c0_i32, %c0_i32_0 : i32, i32
  }
  func.func @transform_7(%arg0: i32) -> (i32, i32) {
    %c0_i32 = arith.constant 0 : i32
    %c0_i32_0 = arith.constant 0 : i32
    return %arg0, %c0_i32 : i32, i32
  }
}

</mosaic_0001>

<llo_original>
// kernel: tpu_custom_call.1
$region0: #{tpu_custom_call.1}
  #allocation0 [shape = 'u32[]', space=smem, size = 0x4, offset = 0x4, fixed_abs, tag = 'smem constant byte address 0x4 - core index']
  #allocation1 [shape = 'u32[72,128]{1,0:T(1,128)}', space=vmem, size = 0x9000, scoped, tag = 'internal scratch']
  %s0 = inlined_call_operand.vmem [shape: f32[304,1], index: 0, kind: input, shape index: {}]
  %s1 = inlined_call_operand.vmem [shape: f32[1,384], index: 1, kind: input, shape index: {}]
  %s2 = inlined_call_operand.vmem [shape: f32[1,384], index: 2, kind: input, shape index: {}]
  %s3 = inlined_call_operand.hbm [shape: bf16[384,384], index: 3, kind: input, shape index: {}]
  %s4 = inlined_call_operand.vmem [shape: f32[1,384], index: 4, kind: input, shape index: {}]
  %s5 = inlined_call_operand.hbm [shape: bf16[384,384], index: 5, kind: input, shape index: {}]
  %s6 = inlined_call_operand.vmem [shape: f32[1,384], index: 6, kind: input, shape index: {}]
  %s7 = inlined_call_operand.hbm [shape: bf16[304,384], index: 7, kind: output, shape index: {}]
  %s8 = sld [smem:[#allocation0]]
  $region69: #{tpu_custom_call.1} parent=0
    _
  %s10 = ssub.s32 1, %s8
  %s11 = scalar_select 0, %s10, %s8
  $region1: #{tpu_custom_call.1} parent=0
    #allocation2 [shape = 'u8[294912]{0}', space=vmem, size = 0x48000, scoped, tag = 'input window, operand 3, single buffered']
    #allocation3 [shape = 's32[2]{0}', space=sflag, size = 0x8, scoped, tag = 'scoped memory for tpu_custom_call.1']
    #allocation4 [shape = 's32[2]{0}', space=sflag, size = 0x8, scoped, tag = 'scoped memory for tpu_custom_call.1']
    #allocation5 [shape = 'u8[294912]{0}', space=vmem, size = 0x48000, scoped, tag = 'input window, operand 5, single buffered']
    #allocation6 [shape = 's32[1]{0}', space=sflag, size = 0x4, scoped, tag = 'scoped memory for tpu_custom_call.1']
    #allocation7 [shape = 'u8[233472]{0}', space=vmem, size = 0x39000, scoped, tag = 'output window, operand 0']
    %12 = vsyncpa [#allocation3], 0
    %13 = vsyncpa [#allocation6], 0
    %14 = vsyncpa [#allocation4], 0
    %s15 = scalar_lea.sflag [#allocation4], 1
    %16 = vsyncpa %s15, 0
    loop: start=0, step=1, limit=4
    $region2: #{tpu_custom_call.1} parent=1 // loop_pre_header
      _
    $region3: #{tpu_custom_call.1} parent=1 // loop_header
      %s18 = sphi 0, %s22
      %p19 = scmp.ge.s32.totalorder %s18, 4
      %s28 = sphi 0, %s30
      %s31 = sphi 0, %s28
      %s32 = sphi 0, %s31
      %s48 = sphi 0, %s32
      %s52 = sphi 0, %s52
      %s54 = sphi 0, %s52
      %s55 = sphi 0, %s54
      %s69 = sphi 0, %s55
      %s73 = sphi 0, %s73
      %s75 = sphi 0, %s73
      %s76 = sphi 0, %s75
      %s90 = sphi 0, %s76
      %s94 = sphi 0, %s94
      %s96 = sphi 0, %s94
      %s97 = sphi 0, %s96
      %s111 = sphi 0, %s97
      %s115 = sphi 0, %s115
      %s117 = sphi 0, %s115
      %s118 = sphi 0, %s117
      %s132 = sphi 0, %s118
      %s136 = sphi 0, %s136
      %s138 = sphi 0, %s136
      %s139 = sphi 0, %s138
      %s153 = sphi 0, %s139
      %s157 = sphi 0, %s157
      %s159 = sphi 0, %s157
      %s160 = sphi 0, %s159
      %s174 = sphi 0, %s160
      %s180 = sphi 0, %s182
      %s183 = sphi 0, %s180
      %s184 = sphi 0, %s183
      %s200 = sphi 0, %s184
    $region4: #{tpu_custom_call.1} parent=1 // loop_header_branch
      %21 = sbr.rel (%p19) target = $region8
    $region5: #{tpu_custom_call.1} parent=1 // loop_body
      %s23 = ssub.s32 %s18, 1
      %s24 = ssub.s32 %s18, 2
      %s25 = sadd.s32 %s18, 1
      %s26 = ssub.s32 %s18, %s25
      %p27 = scmp.eq.s32.totalorder %s26, 0
      %s29 = sadd.s32 %s28, 1
      %s30 = scalar_select %p27, %s28, %s29
      %p33 = pneg %p27
      %p34 = scmp.eq.s32.totalorder %s18, 1
      %p35 = por %p33, %p34
      %p36 = scmp.ne.s32.totalorder %s28, %s31
      %p37 = scmp.eq.s32.totalorder %s18, 0
      %p38 = por %p36, %p37
      %p39 = scmp.ne.s32.totalorder %s28, %s31
      %p40 = scmp.eq.s32.totalorder %s23, 1
      %p41 = por %p39, %p40
      %p42 = scmp.ne.s32.totalorder %s31, %s32
      %p43 = scmp.eq.s32.totalorder %s23, 0
      %p44 = por %p42, %p43
      %p45 = scmp.ne.s32.totalorder %s31, %s32
      %p46 = scmp.eq.s32.totalorder %s24, 1
      %p47 = por %p45, %p46
      %p49 = scmp.ne.s32.totalorder %s32, %s48
      %p50 = scmp.eq.s32.totalorder %s24, 0
      %p51 = por %p49, %p50
      %s53 = sadd.s32 %s52, 1
      %p56 = scmp.eq.s32.totalorder %s18, 1
      %p57 = scmp.ne.s32.totalorder %s52, %s54
      %p58 = scmp.eq.s32.totalorder %s18, 0
      %p59 = por %p57, %p58
      %p60 = scmp.ne.s32.totalorder %s52, %s54
      %p61 = scmp.eq.s32.totalorder %s23, 1
      %p62 = por %p60, %p61
      %p63 = scmp.ne.s32.totalorder %s54, %s55
      %p64 = scmp.eq.s32.totalorder %s23, 0
      %p65 = por %p63, %p64
      %p66 = scmp.ne.s32.totalorder %s54, %s55
      %p67 = scmp.eq.s32.totalorder %s24, 1
      %p68 = por %p66, %p67
      %p70 = scmp.ne.s32.totalorder %s55, %s69
      %p71 = scmp.eq.s32.totalorder %s24, 0
      %p72 = por %p70, %p71
      %s74 = sadd.s32 %s73, 1
      %p77 = scmp.eq.s32.totalorder %s18, 1
      %p78 = scmp.ne.s32.totalorder %s73, %s75
      %p79 = scmp.eq.s32.totalorder %s18, 0
      %p80 = por %p78, %p79
      %p81 = scmp.ne.s32.totalorder %s73, %s75
      %p82 = scmp.eq.s32.totalorder %s23, 1
      %p83 = por %p81, %p82
      %p84 = scmp.ne.s32.totalorder %s75, %s76
      %p85 = scmp.eq.s32.totalorder %s23, 0
      %p86 = por %p84, %p85
      %p87 = scmp.ne.s32.totalorder %s75, %s76
      %p88 = scmp.eq.s32.totalorder %s24, 1
      %p89 = por %p87, %p88
      %p91 = scmp.ne.s32.totalorder %s76, %s90
      %p92 = scmp.eq.s32.totalorder %s24, 0
      %p93 = por %p91, %p92
      %s95 = sadd.s32 %s94, 1
      %p98 = scmp.eq.s32.totalorder %s18, 1
      %p99 = scmp.ne.s32.totalorder %s94, %s96
      %p100 = scmp.eq.s32.totalorder %s18, 0
      %p101 = por %p99, %p100
      %p102 = scmp.ne.s32.totalorder %s94, %s96
      %p103 = scmp.eq.s32.totalorder %s23, 1
      %p104 = por %p102, %p103
      %p105 = scmp.ne.s32.totalorder %s96, %s97
      %p106 = scmp.eq.s32.totalorder %s23, 0
      %p107 = por %p105, %p106
      %p108 = scmp.ne.s32.totalorder %s96, %s97
      %p109 = scmp.eq.s32.totalorder %s24, 1
      %p110 = por %p108, %p109
      %p112 = scmp.ne.s32.totalorder %s97, %s111
      %p113 = scmp.eq.s32.totalorder %s24, 0
      %p114 = por %p112, %p113
      %s116 = sadd.s32 %s115, 1
      %p119 = scmp.eq.s32.totalorder %s18, 1
      %p120 = scmp.ne.s32.totalorder %s115, %s117
      %p121 = scmp.eq.s32.totalorder %s18, 0
      %p122 = por %p120, %p121
      %p123 = scmp.ne.s32.totalorder %s115, %s117
      %p124 = scmp.eq.s32.totalorder %s23, 1
      %p125 = por %p123, %p124
      %p126 = scmp.ne.s32.totalorder %s117, %s118
      %p127 = scmp.eq.s32.totalorder %s23, 0
      %p128 = por %p126, %p127
      %p129 = scmp.ne.s32.totalorder %s117, %s118
      %p130 = scmp.eq.s32.totalorder %s24, 1
      %p131 = por %p129, %p130
      %p133 = scmp.ne.s32.totalorder %s118, %s132
      %p134 = scmp.eq.s32.totalorder %s24, 0
      %p135 = por %p133, %p134
      %s137 = sadd.s32 %s136, 1
      %p140 = scmp.eq.s32.totalorder %s18, 1
      %p141 = scmp.ne.s32.totalorder %s136, %s138
      %p142 = scmp.eq.s32.totalorder %s18, 0
      %p143 = por %p141, %p142
      %p144 = scmp.ne.s32.totalorder %s136, %s138
      %p145 = scmp.eq.s32.totalorder %s23, 1
      %p146 = por %p144, %p145
      %p147 = scmp.ne.s32.totalorder %s138, %s139
      %p148 = scmp.eq.s32.totalorder %s23, 0
      %p149 = por %p147, %p148
      %p150 = scmp.ne.s32.totalorder %s138, %s139
      %p151 = scmp.eq.s32.totalorder %s24, 1
      %p152 = por %p150, %p151
      %p154 = scmp.ne.s32.totalorder %s139, %s153
      %p155 = scmp.eq.s32.totalorder %s24, 0
      %p156 = por %p154, %p155
      %s158 = sadd.s32 %s157, 1
      %p161 = scmp.eq.s32.totalorder %s18, 1
      %p162 = scmp.ne.s32.totalorder %s157, %s159
      %p163 = scmp.eq.s32.totalorder %s18, 0
      %p164 = por %p162, %p163
      %p165 = scmp.ne.s32.totalorder %s157, %s159
      %p166 = scmp.eq.s32.totalorder %s23, 1
      %p167 = por %p165, %p166
      %p168 = scmp.ne.s32.totalorder %s159, %s160
      %p169 = scmp.eq.s32.totalorder %s23, 0
      %p170 = por %p168, %p169
      %p171 = scmp.ne.s32.totalorder %s159, %s160
      %p172 = scmp.eq.s32.totalorder %s24, 1
      %p173 = por %p171, %p172
      %p175 = scmp.ne.s32.totalorder %s160, %s174
      %p176 = scmp.eq.s32.totalorder %s24, 0
      %p177 = por %p175, %p176
      %s178 = ssub.s32 %s18, %s25
      %p179 = scmp.eq.s32.totalorder %s178, 0
      %s181 = sadd.s32 %s180, 1
      %s182 = scalar_select %p179, %s180, %s181
      %p185 = pneg %p179
      %p186 = scmp.eq.s32.totalorder %s18, 1
      %p187 = por %p185, %p186
      %p188 = scmp.ne.s32.totalorder %s180, %s183
      %p189 = scmp.eq.s32.totalorder %s18, 0
      %p190 = por %p188, %p189
      %p191 = scmp.ne.s32.totalorder %s180, %s183
      %p192 = scmp.eq.s32.totalorder %s23, 1
      %p193 = por %p191, %p192
      %p194 = scmp.ne.s32.totalorder %s183, %s184
      %p195 = scmp.eq.s32.totalorder %s23, 0
      %p196 = por %p194, %p195
      %p197 = scmp.ne.s32.totalorder %s183, %s184
      %p198 = scmp.eq.s32.totalorder %s24, 1
      %p199 = por %p197, %p198
      %p201 = scmp.ne.s32.totalorder %s184, %s200
      %p202 = scmp.eq.s32.totalorder %s24, 0
      %p203 = por %p201, %p202
      %p204 = scmp.le.s32.totalorder 1, %s18
      %p205 = scmp.lt.s32.totalorder %s18, 3
      %p206 = pnand %p204, %p205
      %p207 = pneg %p206
      // Predicated region
      $region9: #{tpu_custom_call.1} parent=5 // pred_check
        _
      $region10: #{tpu_custom_call.1} parent=5 // pred_check_branch
        %209 = sbr.rel (%p206) target = $region12
      $region11: #{tpu_custom_call.1} parent=5 // pred_region
        %s210 = ssub.s32 %s18, 1
        // Predicated region
        $region13: #{tpu_custom_call.1} parent=11 // pred_check
          %p211 = pneg %p65
        $region14: #{tpu_custom_call.1} parent=11 // pred_check_branch
          %213 = sbr.rel (%p211) target = $region16
        $region15: #{tpu_custom_call.1} parent=11 // pred_region
          _
        $region16: #{tpu_custom_call.1} parent=11 // pred_fallthru
          _
        // Predicated region
        $region17: #{tpu_custom_call.1} parent=11 // pred_check
          %p214 = pneg %p86
        $region18: #{tpu_custom_call.1} parent=11 // pred_check_branch
          %216 = sbr.rel (%p214) target = $region20
        $region19: #{tpu_custom_call.1} parent=11 // pred_region
          _
        $region20: #{tpu_custom_call.1} parent=11 // pred_fallthru
          _
        // Predicated region
        $region21: #{tpu_custom_call.1} parent=11 // pred_check
          %p217 = pneg %p107
        $region22: #{tpu_custom_call.1} parent=11 // pred_check_branch
          %219 = sbr.rel (%p217) target = $region24
        $region23: #{tpu_custom_call.1} parent=11 // pred_region
          %221 = vsyncadd [#allocation3], 0
          %s222 = sshll.u32 %s3, 4
          %s223 = int_to_ptr.hbm [resolvable:$true] %s222
          %s224 = sshll.u32 [#allocation2], 4
          %s225 = int_to_ptr.vmem [resolvable:$true] %s224
          %230 = dma.hbm_to_vmem [thread:$0]  %s223, 9216, %s225, [#allocation3], 192, 192, 12
        $region24: #{tpu_custom_call.1} parent=11 // pred_fallthru
          _
        // Predicated region
        $region25: #{tpu_custom_call.1} parent=11 // pred_check
          %p231 = pneg %p128
        $region26: #{tpu_custom_call.1} parent=11 // pred_check_branch
          %233 = sbr.rel (%p231) target = $region28
        $region27: #{tpu_custom_call.1} parent=11 // pred_region
          _
        $region28: #{tpu_custom_call.1} parent=11 // pred_fallthru
          _
        // Predicated region
        $region29: #{tpu_custom_call.1} parent=11 // pred_check
          %p234 = pneg %p149
        $region30: #{tpu_custom_call.1} parent=11 // pred_check_branch
          %236 = sbr.rel (%p234) target = $region32
        $region31: #{tpu_custom_call.1} parent=11 // pred_region
          %238 = vsyncadd [#allocation6], 0
          %s239 = sshll.u32 %s5, 4
          %s240 = int_to_ptr.hbm [resolvable:$true] %s239
          %s241 = sshll.u32 [#allocation5], 4
          %s242 = int_to_ptr.vmem [resolvable:$true] %s241
          %247 = dma.hbm_to_vmem [thread:$0]  %s240, 9216, %s242, [#allocation6], 192, 192, 12
        $region32: #{tpu_custom_call.1} parent=11 // pred_fallthru
          _
        // Predicated region
        $region33: #{tpu_custom_call.1} parent=11 // pred_check
          %p248 = pneg %p170
        $region34: #{tpu_custom_call.1} parent=11 // pred_check_branch
          %250 = sbr.rel (%p248) target = $region36
        $region35: #{tpu_custom_call.1} parent=11 // pred_region
          _
        $region36: #{tpu_custom_call.1} parent=11 // pred_fallthru
          _
      $region12: #{tpu_custom_call.1} parent=5 // pred_fallthru
        _
      %p251 = scmp.lt.s32.totalorder %s18, 2
      // Predicated region
      $region37: #{tpu_custom_call.1} parent=5 // pred_check
        %p252 = pneg %p251
      $region38: #{tpu_custom_call.1} parent=5 // pred_check_branch
        %254 = sbr.rel (%p252) target = $region40
      $region39: #{tpu_custom_call.1} parent=5 // pred_region
        // Predicated region
        $region41: #{tpu_custom_call.1} parent=39 // pred_check
          %p255 = pneg %p38
        $region42: #{tpu_custom_call.1} parent=39 // pred_check_branch
          %257 = sbr.rel (%p255) target = $region44
        $region43: #{tpu_custom_call.1} parent=39 // pred_region
          %s258 = smul.u32 19, %s18
          %p259 = scmp.lt.s32.totalorder %s258, 37
          %s260 = scalar_select %p259, %s258, 37
          %s261 = smul.addr %s260, 8
          %s262 = scalar_lea.vmem %s0, %s261
          %s263 = smul.u32 19, %s18
        $region44: #{tpu_custom_call.1} parent=39 // pred_fallthru
          _
      $region40: #{tpu_custom_call.1} parent=5 // pred_fallthru
        _
      %p264 = scmp.le.s32.totalorder 1, %s18
      %p265 = scmp.lt.s32.totalorder %s18, 3
      %p266 = pnand %p264, %p265
      %p267 = pneg %p266
      // Predicated region
      $region45: #{tpu_custom_call.1} parent=5 // pred_check
        _
      $region46: #{tpu_custom_call.1} parent=5 // pred_check_branch
        %269 = sbr.rel (%p266) target = $region48
      $region47: #{tpu_custom_call.1} parent=5 // pred_region
        %s270 = ssub.s32 %s18, 1
        // Predicated region
        $region49: #{tpu_custom_call.1} parent=47 // pred_check
          %p271 = pneg %p107
        $region50: #{tpu_custom_call.1} parent=47 // pred_check_branch
          %273 = sbr.rel (%p271) target = $region52
        $region51: #{tpu_custom_call.1} parent=47 // pred_region
          %275 = dma.done [#allocation3], 9216
        $region52: #{tpu_custom_call.1} parent=47 // pred_fallthru
          _
        // Predicated region
        $region53: #{tpu_custom_call.1} parent=47 // pred_check
          %p276 = pneg %p149
        $region54: #{tpu_custom_call.1} parent=47 // pred_check_branch
          %278 = sbr.rel (%p276) target = $region56
        $region55: #{tpu_custom_call.1} parent=47 // pred_region
          %280 = dma.done [#allocation6], 9216
        $region56: #{tpu_custom_call.1} parent=47 // pred_fallthru
          _
        %s281 = smul.u32 19, %s23
        %p282 = scmp.lt.s32.totalorder %s281, 37
        %s283 = scalar_select %p282, %s281, 37
        %s284 = smul.addr %s283, 8
        %s285 = scalar_lea.vmem %s0, %s284
        %p286 = pneg %p44
        %p287 = pneg %p41
        %p288 = pneg %p65
        %p289 = pneg %p62
        %p290 = pneg %p86
        %p291 = pneg %p83
        %p292 = pneg %p107
        %p293 = pneg %p104
        %p294 = pneg %p128
        %p295 = pneg %p125
        %p296 = pneg %p149
        %p297 = pneg %p146
        %p298 = pneg %p170
        %p299 = pneg %p167
        %p300 = pneg %p196
        %p301 = pneg %p193
        %s302 = sand.u32 %s183, 1
        %s303 = scalar_lea.sflag [#allocation4], %s302
        %s304 = sand.u32 %s183, 1
        %s305 = smul.addr %s304, 228
        %s306 = scalar_lea.vmem [#allocation7], %s305
        %s307 = smul.u32 19, %s23
        %p308 = scmp.lt.s32.totalorder %s307, 37
        %s309 = scalar_select %p308, %s307, 37
        %s310 = smul.addr %s309, 8
        %s311 = scalar_lea.vmem %s0, %s310
        %s312 = smul.u32 19, %s23
        %s313 = smul.u32 19, %s23
        %v314 = vld [vmem:[%s311] sm:$0xff]
        %v315 = vld [vmem:[%s311 + $0x8] sm:$0xff]
        %v316 = vld [vmem:[%s311 + $0x10] sm:$0xff]
        %v317 = vld [vmem:[%s311 + $0x18] sm:$0xff]
        %v318 = vld [vmem:[%s311 + $0x20] sm:$0xff]
        %v319 = vld [vmem:[%s311 + $0x28] sm:$0xff]
        %v320 = vld [vmem:[%s311 + $0x30] sm:$0xff]
        %v321 = vld [vmem:[%s311 + $0x38] sm:$0xff]
        %v322 = vld [vmem:[%s311 + $0x40] sm:$0xff]
        %v323 = vld [vmem:[%s311 + $0x48] sm:$0xff]
        %v324 = vld [vmem:[%s311 + $0x50] sm:$0xff]
        %v325 = vld [vmem:[%s311 + $0x58] sm:$0xff]
        %v326 = vld [vmem:[%s311 + $0x60] sm:$0xff]
        %v327 = vld [vmem:[%s311 + $0x68] sm:$0xff]
        %v328 = vld [vmem:[%s311 + $0x70] sm:$0xff]
        %v329 = vld [vmem:[%s311 + $0x78] sm:$0xff]
        %v330 = vld [vmem:[%s311 + $0x80] sm:$0xff]
        %v331 = vld [vmem:[%s311 + $0x88] sm:$0xff]
        %v332 = vld [vmem:[%s311 + $0x90] sm:$0xff]
        %v333 = vld [vmem:[%s1] sm:$0x7]
        %335 = vset.pattern.permute.xlu0 0
        %336 = vperm.xlu0 %335, %v314
        %v337 = vpop.permute.xlu0 %336
        %340 = vset.pattern.permute.xlu0 0
        %341 = vperm.xlu0 %340, %v315
        %v342 = vpop.permute.xlu0 %341
        %345 = vset.pattern.permute.xlu0 0
        %346 = vperm.xlu0 %345, %v316
        %v347 = vpop.permute.xlu0 %346
        %350 = vset.pattern.permute.xlu0 0
        %351 = vperm.xlu0 %350, %v317
        %v352 = vpop.permute.xlu0 %351
        %355 = vset.pattern.permute.xlu0 0
        %356 = vperm.xlu0 %355, %v318
        %v357 = vpop.permute.xlu0 %356
        %360 = vset.pattern.permute.xlu0 0
        %361 = vperm.xlu0 %360, %v319
        %v362 = vpop.permute.xlu0 %361
        %365 = vset.pattern.permute.xlu0 0
        %366 = vperm.xlu0 %365, %v320
        %v367 = vpop.permute.xlu0 %366
        %370 = vset.pattern.permute.xlu0 0
        %371 = vperm.xlu0 %370, %v321
        %v372 = vpop.permute.xlu0 %371
        %375 = vset.pattern.permute.xlu0 0
        %376 = vperm.xlu0 %375, %v322
        %v377 = vpop.permute.xlu0 %376
        %380 = vset.pattern.permute.xlu0 0
        %381 = vperm.xlu0 %380, %v323
        %v382 = vpop.permute.xlu0 %381
        %385 = vset.pattern.permute.xlu0 0
        %386 = vperm.xlu0 %385, %v324
        %v387 = vpop.permute.xlu0 %386
        %390 = vset.pattern.permute.xlu0 0
        %391 = vperm.xlu0 %390, %v325
        %v392 = vpop.permute.xlu0 %391
        %395 = vset.pattern.permute.xlu0 0
        %396 = vperm.xlu0 %395, %v326
        %v397 = vpop.permute.xlu0 %396
        %400 = vset.pattern.permute.xlu0 0
        %401 = vperm.xlu0 %400, %v327
        %v402 = vpop.permute.xlu0 %401
        %405 = vset.pattern.permute.xlu0 0
        %406 = vperm.xlu0 %405, %v328
        %v407 = vpop.permute.xlu0 %406
        %410 = vset.pattern.permute.xlu0 0
        %411 = vperm.xlu0 %410, %v329
        %v412 = vpop.permute.xlu0 %411
        %415 = vset.pattern.permute.xlu0 0
        %416 = vperm.xlu0 %415, %v330
        %v417 = vpop.permute.xlu0 %416
        %420 = vset.pattern.permute.xlu0 0
        %421 = vperm.xlu0 %420, %v331
        %v422 = vpop.permute.xlu0 %421
        %425 = vset.pattern.permute.xlu0 0
        %426 = vperm.xlu0 %425, %v332
        %v427 = vpop.permute.xlu0 %426
        %v430 = vperm.slane %v333, 0
        %v431 = vperm.slane %v333, 1
        %v432 = vperm.slane %v333, 2
        %v436 = vmul.f32 %v337, %v430
        %v437 = vmul.f32 %v337, %v431
        %v438 = vmul.f32 %v337, %v432
        %v439 = vmul.f32 %v342, %v430
        %v440 = vmul.f32 %v342, %v431
        %v441 = vmul.f32 %v342, %v432
        %v442 = vmul.f32 %v347, %v430
        %v443 = vmul.f32 %v347, %v431
        %v444 = vmul.f32 %v347, %v432
        %v445 = vmul.f32 %v352, %v430
        %v446 = vmul.f32 %v352, %v431
        %v447 = vmul.f32 %v352, %v432
        %v448 = vmul.f32 %v357, %v430
        %v449 = vmul.f32 %v357, %v431
        %v450 = vmul.f32 %v357, %v432
        %v451 = vmul.f32 %v362, %v430
        %v452 = vmul.f32 %v362, %v431
        %v453 = vmul.f32 %v362, %v432
        %v454 = vmul.f32 %v367, %v430
        %v455 = vmul.f32 %v367, %v431
        %v456 = vmul.f32 %v367, %v432
        %v457 = vmul.f32 %v372, %v430
        %v458 = vmul.f32 %v372, %v431
        %v459 = vmul.f32 %v372, %v432
        %v460 = vmul.f32 %v377, %v430
        %v461 = vmul.f32 %v377, %v431
        %v462 = vmul.f32 %v377, %v432
        %v463 = vmul.f32 %v382, %v430
        %v464 = vmul.f32 %v382, %v431
        %v465 = vmul.f32 %v382, %v432
        %v466 = vmul.f32 %v387, %v430
        %v467 = vmul.f32 %v387, %v431
        %v468 = vmul.f32 %v387, %v432
        %v469 = vmul.f32 %v392, %v430
        %v470 = vmul.f32 %v392, %v431
        %v471 = vmul.f32 %v392, %v432
        %v472 = vmul.f32 %v397, %v430
        %v473 = vmul.f32 %v397, %v431
        %v474 = vmul.f32 %v397, %v432
        %v475 = vmul.f32 %v402, %v430
        %v476 = vmul.f32 %v402, %v431
        %v477 = vmul.f32 %v402, %v432
        %v478 = vmul.f32 %v407, %v430
        %v479 = vmul.f32 %v407, %v431
        %v480 = vmul.f32 %v407, %v432
        %v481 = vmul.f32 %v412, %v430
        %v482 = vmul.f32 %v412, %v431
        %v483 = vmul.f32 %v412, %v432
        %v484 = vmul.f32 %v417, %v430
        %v485 = vmul.f32 %v417, %v431
        %v486 = vmul.f32 %v417, %v432
        %v487 = vmul.f32 %v422, %v430
        %v488 = vmul.f32 %v422, %v431
        %v489 = vmul.f32 %v422, %v432
        %v490 = vmul.f32 %v427, %v430
        %v491 = vmul.f32 %v427, %v431
        %v492 = vmul.f32 %v427, %v432
        %v493 = vld [vmem:[%s2] sm:$0x7]
        %v495 = vperm.slane %v493, 0
        %v496 = vperm.slane %v493, 1
        %v497 = vperm.slane %v493, 2
        %v501 = vadd.f32 %v436, %v495
        %v502 = vadd.f32 %v437, %v496
        %v503 = vadd.f32 %v438, %v497
        %v504 = vadd.f32 %v439, %v495
        %v505 = vadd.f32 %v440, %v496
        %v506 = vadd.f32 %v441, %v497
        %v507 = vadd.f32 %v442, %v495
        %v508 = vadd.f32 %v443, %v496
        %v509 = vadd.f32 %v444, %v497
        %v510 = vadd.f32 %v445, %v495
        %v511 = vadd.f32 %v446, %v496
        %v512 = vadd.f32 %v447, %v497
        %v513 = vadd.f32 %v448, %v495
        %v514 = vadd.f32 %v449, %v496
        %v515 = vadd.f32 %v450, %v497
        %v516 = vadd.f32 %v451, %v495
        %v517 = vadd.f32 %v452, %v496
        %v518 = vadd.f32 %v453, %v497
        %v519 = vadd.f32 %v454, %v495
        %v520 = vadd.f32 %v455, %v496
        %v521 = vadd.f32 %v456, %v497
        %v522 = vadd.f32 %v457, %v495
        %v523 = vadd.f32 %v458, %v496
        %v524 = vadd.f32 %v459, %v497
        %v525 = vadd.f32 %v460, %v495
        %v526 = vadd.f32 %v461, %v496
        %v527 = vadd.f32 %v462, %v497
        %v528 = vadd.f32 %v463, %v495
        %v529 = vadd.f32 %v464, %v496
        %v530 = vadd.f32 %v465, %v497
        %v531 = vadd.f32 %v466, %v495
        %v532 = vadd.f32 %v467, %v496
        %v533 = vadd.f32 %v468, %v497
        %v534 = vadd.f32 %v469, %v495
        %v535 = vadd.f32 %v470, %v496
        %v536 = vadd.f32 %v471, %v497
        %v537 = vadd.f32 %v472, %v495
        %v538 = vadd.f32 %v473, %v496
        %v539 = vadd.f32 %v474, %v497
        %v540 = vadd.f32 %v475, %v495
        %v541 = vadd.f32 %v476, %v496
        %v542 = vadd.f32 %v477, %v497
        %v543 = vadd.f32 %v478, %v495
        %v544 = vadd.f32 %v479, %v496
        %v545 = vadd.f32 %v480, %v497
        %v546 = vadd.f32 %v481, %v495
        %v547 = vadd.f32 %v482, %v496
        %v548 = vadd.f32 %v483, %v497
        %v549 = vadd.f32 %v484, %v495
        %v550 = vadd.f32 %v485, %v496
        %v551 = vadd.f32 %v486, %v497
        %v552 = vadd.f32 %v487, %v495
        %v553 = vadd.f32 %v488, %v496
        %v554 = vadd.f32 %v489, %v497
        %v555 = vadd.f32 %v490, %v495
        %v556 = vadd.f32 %v491, %v496
        %v557 = vadd.f32 %v492, %v497
        %v558 = vmax.f32 %v501, 0.0
        %v559 = vmax.f32 %v502, 0.0
        %v560 = vmax.f32 %v503, 0.0
        %v561 = vmax.f32 %v504, 0.0
        %v562 = vmax.f32 %v505, 0.0
        %v563 = vmax.f32 %v506, 0.0
        %v564 = vmax.f32 %v507, 0.0
        %v565 = vmax.f32 %v508, 0.0
        %v566 = vmax.f32 %v509, 0.0
        %v567 = vmax.f32 %v510, 0.0
        %v568 = vmax.f32 %v511, 0.0
        %v569 = vmax.f32 %v512, 0.0
        %v570 = vmax.f32 %v513, 0.0
        %v571 = vmax.f32 %v514, 0.0
        %v572 = vmax.f32 %v515, 0.0
        %v573 = vmax.f32 %v516, 0.0
        %v574 = vmax.f32 %v517, 0.0
        %v575 = vmax.f32 %v518, 0.0
        %v576 = vmax.f32 %v519, 0.0
        %v577 = vmax.f32 %v520, 0.0
        %v578 = vmax.f32 %v521, 0.0
        %v579 = vmax.f32 %v522, 0.0
        %v580 = vmax.f32 %v523, 0.0
        %v581 = vmax.f32 %v524, 0.0
        %v582 = vmax.f32 %v525, 0.0
        %v583 = vmax.f32 %v526, 0.0
        %v584 = vmax.f32 %v527, 0.0
        %v585 = vmax.f32 %v528, 0.0
        %v586 = vmax.f32 %v529, 0.0
        %v587 = vmax.f32 %v530, 0.0
        %v588 = vmax.f32 %v531, 0.0
        %v589 = vmax.f32 %v532, 0.0
        %v590 = vmax.f32 %v533, 0.0
        %v591 = vmax.f32 %v534, 0.0
        %v592 = vmax.f32 %v535, 0.0
        %v593 = vmax.f32 %v536, 0.0
        %v594 = vmax.f32 %v537, 0.0
        %v595 = vmax.f32 %v538, 0.0
        %v596 = vmax.f32 %v539, 0.0
        %v597 = vmax.f32 %v540, 0.0
        %v598 = vmax.f32 %v541, 0.0
        %v599 = vmax.f32 %v542, 0.0
        %v600 = vmax.f32 %v543, 0.0
        %v601 = vmax.f32 %v544, 0.0
        %v602 = vmax.f32 %v545, 0.0
        %v603 = vmax.f32 %v546, 0.0
        %v604 = vmax.f32 %v547, 0.0
        %v605 = vmax.f32 %v548, 0.0
        %v606 = vmax.f32 %v549, 0.0
        %v607 = vmax.f32 %v550, 0.0
        %v608 = vmax.f32 %v551, 0.0
        %v609 = vmax.f32 %v552, 0.0
        %v610 = vmax.f32 %v553, 0.0
        %v611 = vmax.f32 %v554, 0.0
        %v612 = vmax.f32 %v555, 0.0
        %v613 = vmax.f32 %v556, 0.0
        %v614 = vmax.f32 %v557, 0.0
        %v615 = vpack.c.bf16 %v561, %v558
        %v616 = vpack.c.bf16 %v562, %v559
        %v617 = vpack.c.bf16 %v563, %v560
        %v618 = vpack.c.bf16 %v567, %v564
        %v619 = vpack.c.bf16 %v568, %v565
        %v620 = vpack.c.bf16 %v569, %v566
        %v621 = vpack.c.bf16 %v573, %v570
        %v622 = vpack.c.bf16 %v574, %v571
        %v623 = vpack.c.bf16 %v575, %v572
        %v624 = vpack.c.bf16 %v579, %v576
        %v625 = vpack.c.bf16 %v580, %v577
        %v626 = vpack.c.bf16 %v581, %v578
        %v627 = vpack.c.bf16 %v585, %v582
        %v628 = vpack.c.bf16 %v586, %v583
        %v629 = vpack.c.bf16 %v587, %v584
        %v630 = vpack.c.bf16 %v591, %v588
        %v631 = vpack.c.bf16 %v592, %v589
        %v632 = vpack.c.bf16 %v593, %v590
        %v633 = vpack.c.bf16 %v597, %v594
        %v634 = vpack.c.bf16 %v598, %v595
        %v635 = vpack.c.bf16 %v599, %v596
        %v636 = vpack.c.bf16 %v603, %v600
        %v637 = vpack.c.bf16 %v604, %v601
        %v638 = vpack.c.bf16 %v605, %v602
        %v639 = vpack.c.bf16 %v609, %v606
        %v640 = vpack.c.bf16 %v610, %v607
        %v641 = vpack.c.bf16 %v611, %v608
        %v642 = vpack.c.bf16 %v612, %v612
        %v643 = vpack.c.bf16 %v613, %v613
        %v644 = vpack.c.bf16 %v614, %v614
        %v645 = vld [vmem:[#allocation2] sm:$0xff]
        %v646 = vld [vmem:[#allocation2 + $0x8] sm:$0xf]
        %v647 = vld [vmem:[#allocation2 + $0xc] sm:$0xff]
        %v648 = vld [vmem:[#allocation2 + $0x14] sm:$0xf]
        %v649 = vld [vmem:[#allocation2 + $0x18] sm:$0xff]
        %v650 = vld [vmem:[#allocation2 + $0x20] sm:$0xf]
        %v651 = vld [vmem:[#allocation2 + $0x24] sm:$0xff]
        %v652 = vld [vmem:[#allocation2 + $0x2c] sm:$0xf]
        %v653 = vld [vmem:[#allocation2 + $0x30] sm:$0xff]
        %v654 = vld [vmem:[#allocation2 + $0x38] sm:$0xf]
        %v655 = vld [vmem:[#allocation2 + $0x3c] sm:$0xff]
        %v656 = vld [vmem:[#allocation2 + $0x44] sm:$0xf]
        %v657 = vld [vmem:[#allocation2 + $0x48] sm:$0xff]
        %v658 = vld [vmem:[#allocation2 + $0x50] sm:$0xf]
        %v659 = vld [vmem:[#allocation2 + $0x54] sm:$0xff]
        %v660 = vld [vmem:[#allocation2 + $0x5c] sm:$0xf]
        %v661 = vld [vmem:[#allocation2 + $0x60] sm:$0xff]
        %v662 = vld [vmem:[#allocation2 + $0x68] sm:$0xf]
        %v663 = vld [vmem:[#allocation2 + $0x6c] sm:$0xff]
        %v664 = vld [vmem:[#allocation2 + $0x74] sm:$0xf]
        %v665 = vld [vmem:[#allocation2 + $0x78] sm:$0xff]
        %v666 = vld [vmem:[#allocation2 + $0x80] sm:$0xf]
        %v667 = vld [vmem:[#allocation2 + $0x84] sm:$0xff]
        %v668 = vld [vmem:[#allocation2 + $0x8c] sm:$0xf]
        %v669 = vld [vmem:[#allocation2 + $0x90] sm:$0xff]
        %v670 = vld [vmem:[#allocation2 + $0x98] sm:$0xf]
        %v671 = vld [vmem:[#allocation2 + $0x9c] sm:$0xff]
        %v672 = vld [vmem:[#allocation2 + $0xa4] sm:$0xf]
        %v673 = vld [vmem:[#allocation2 + $0xa8] sm:$0xff]
        %v674 = vld [vmem:[#allocation2 + $0xb0] sm:$0xf]
        %v675 = vld [vmem:[#allocation2 + $0xb4] sm:$0xff]
        %v676 = vld [vmem:[#allocation2 + $0xbc] sm:$0xf]
        %v677 = vld [vmem:[#allocation2 + $0xc0] sm:$0xff]
        %v678 = vld [vmem:[#allocation2 + $0xc8] sm:$0xf]
        %v679 = vld [vmem:[#allocation2 + $0xcc] sm:$0xff]
        %v680 = vld [vmem:[#allocation2 + $0xd4] sm:$0xf]
        %v681 = vld [vmem:[#allocation2 + $0xd8] sm:$0xff]
        %v682 = vld [vmem:[#allocation2 + $0xe0] sm:$0xf]
        %v683 = vld [vmem:[#allocation2 + $0xe4] sm:$0xff]
        %v684 = vld [vmem:[#allocation2 + $0xec] sm:$0xf]
        %v685 = vld [vmem:[#allocation2 + $0xf0] sm:$0xff]
        %v686 = vld [vmem:[#allocation2 + $0xf8] sm:$0xf]
        %v687 = vld [vmem:[#allocation2 + $0xfc] sm:$0xff]
        %v688 = vld [vmem:[#allocation2 + $0x104] sm:$0xf]
        %v689 = vld [vmem:[#allocation2 + $0x108] sm:$0xff]
        %v690 = vld [vmem:[#allocation2 + $0x110] sm:$0xf]
        %v691 = vld [vmem:[#allocation2 + $0x114] sm:$0xff]
        %v692 = vld [vmem:[#allocation2 + $0x11c] sm:$0xf]
        %v693 = vld [vmem:[#allocation2 + $0x120] sm:$0xff]
        %v694 = vld [vmem:[#allocation2 + $0x128] sm:$0xf]
        %v695 = vld [vmem:[#allocation2 + $0x12c] sm:$0xff]
        %v696 = vld [vmem:[#allocation2 + $0x134] sm:$0xf]
        %v697 = vld [vmem:[#allocation2 + $0x138] sm:$0xff]
        %v698 = vld [vmem:[#allocation2 + $0x140] sm:$0xf]
        %v699 = vld [vmem:[#allocation2 + $0x144] sm:$0xff]
        %v700 = vld [vmem:[#allocation2 + $0x14c] sm:$0xf]
        %v701 = vld [vmem:[#allocation2 + $0x150] sm:$0xff]
        %v702 = vld [vmem:[#allocation2 + $0x158] sm:$0xf]
        %v703 = vld [vmem:[#allocation2 + $0x15c] sm:$0xff]
        %v704 = vld [vmem:[#allocation2 + $0x164] sm:$0xf]
        %v705 = vld [vmem:[#allocation2 + $0x168] sm:$0xff]
        %v706 = vld [vmem:[#allocation2 + $0x170] sm:$0xf]
        %v707 = vld [vmem:[#allocation2 + $0x174] sm:$0xff]
        %v708 = vld [vmem:[#allocation2 + $0x17c] sm:$0xf]
        %v709 = vld [vmem:[#allocation2 + $0x180] sm:$0xff]
        %v710 = vld [vmem:[#allocation2 + $0x188] sm:$0xf]
        %v711 = vld [vmem:[#allocation2 + $0x18c] sm:$0xff]
        %v712 = vld [vmem:[#allocation2 + $0x194] sm:$0xf]
        %v713 = vld [vmem:[#allocation2 + $0x198] sm:$0xff]
        %v714 = vld [vmem:[#allocation2 + $0x1a0] sm:$0xf]
        %v715 = vld [vmem:[#allocation2 + $0x1a4] sm:$0xff]
        %v716 = vld [vmem:[#allocation2 + $0x1ac] sm:$0xf]
        %v717 = vld [vmem:[#allocation2 + $0x1b0] sm:$0xff]
        %v718 = vld [vmem:[#allocation2 + $0x1b8] sm:$0xf]
        %v719 = vld [vmem:[#allocation2 + $0x1bc] sm:$0xff]
        %v720 = vld [vmem:[#allocation2 + $0x1c4] sm:$0xf]
        %v721 = vld [vmem:[#allocation2 + $0x1c8] sm:$0xff]
        %v722 = vld [vmem:[#allocation2 + $0x1d0] sm:$0xf]
        %v723 = vld [vmem:[#allocation2 + $0x1d4] sm:$0xff]
        %v724 = vld [vmem:[#allocation2 + $0x1dc] sm:$0xf]
        %v725 = vld [vmem:[#allocation2 + $0x1e0] sm:$0xff]
        %v726 = vld [vmem:[#allocation2 + $0x1e8] sm:$0xf]
        %v727 = vld [vmem:[#allocation2 + $0x1ec] sm:$0xff]
        %v728 = vld [vmem:[#allocation2 + $0x1f4] sm:$0xf]
        %v729 = vld [vmem:[#allocation2 + $0x1f8] sm:$0xff]
        %v730 = vld [vmem:[#allocation2 + $0x200] sm:$0xf]
        %v731 = vld [vmem:[#allocation2 + $0x204] sm:$0xff]
        %v732 = vld [vmem:[#allocation2 + $0x20c] sm:$0xf]
        %v733 = vld [vmem:[#allocation2 + $0x210] sm:$0xff]
        %v734 = vld [vmem:[#allocation2 + $0x218] sm:$0xf]
        %v735 = vld [vmem:[#allocation2 + $0x21c] sm:$0xff]
        %v736 = vld [vmem:[#allocation2 + $0x224] sm:$0xf]
        %v737 = vld [vmem:[#allocation2 + $0x228] sm:$0xff]
        %v738 = vld [vmem:[#allocation2 + $0x230] sm:$0xf]
        %v739 = vld [vmem:[#allocation2 + $0x234] sm:$0xff]
        %v740 = vld [vmem:[#allocation2 + $0x23c] sm:$0xf]
        %v741 = vld [vmem:[%s4] sm:$0x7]
        %v743 = vperm.slane %v741, 0
        %v744 = vperm.slane %v741, 1
        %v745 = vperm.slane %v741, 2
        %v845 = vunpack.c.l.b16 %v645
        %v846 = vunpack.c.h.b16 %v645
        %v847 = vunpack.c.l.b16 %v646
        %v848 = vunpack.c.l.b16 %v647
        %v849 = vunpack.c.h.b16 %v647
        %v850 = vunpack.c.l.b16 %v648
        %v851 = vunpack.c.l.b16 %v649
        %v852 = vunpack.c.h.b16 %v649
        %v853 = vunpack.c.l.b16 %v650
        %v854 = vunpack.c.l.b16 %v651
        %v855 = vunpack.c.h.b16 %v651
        %v856 = vunpack.c.l.b16 %v652
        %v857 = vunpack.c.l.b16 %v653
        %v858 = vunpack.c.h.b16 %v653
        %v859 = vunpack.c.l.b16 %v654
        %v860 = vunpack.c.l.b16 %v655
        %v861 = vunpack.c.h.b16 %v655
        %v862 = vunpack.c.l.b16 %v656
        %v863 = vunpack.c.l.b16 %v657
        %v864 = vunpack.c.h.b16 %v657
        %v865 = vunpack.c.l.b16 %v658
        %v866 = vunpack.c.l.b16 %v659
        %v867 = vunpack.c.h.b16 %v659
        %v868 = vunpack.c.l.b16 %v660
        %v869 = vunpack.c.l.b16 %v661
        %v870 = vunpack.c.h.b16 %v661
        %v871 = vunpack.c.l.b16 %v662
        %v872 = vunpack.c.l.b16 %v663
        %v873 = vunpack.c.h.b16 %v663
        %v874 = vunpack.c.l.b16 %v664
        %v875 = vunpack.c.l.b16 %v665
        %v876 = vunpack.c.h.b16 %v665
        %v877 = vunpack.c.l.b16 %v666
        %v878 = vunpack.c.l.b16 %v667
        %v879 = vunpack.c.h.b16 %v667
        %v880 = vunpack.c.l.b16 %v668
        %v881 = vunpack.c.l.b16 %v669
        %v882 = vunpack.c.h.b16 %v669
        %v883 = vunpack.c.l.b16 %v670
        %v884 = vunpack.c.l.b16 %v671
        %v885 = vunpack.c.h.b16 %v671
        %v886 = vunpack.c.l.b16 %v672
        %v887 = vunpack.c.l.b16 %v673
        %v888 = vunpack.c.h.b16 %v673
        %v889 = vunpack.c.l.b16 %v674
        %v890 = vunpack.c.l.b16 %v675
        %v891 = vunpack.c.h.b16 %v675
        %v892 = vunpack.c.l.b16 %v676
        %v893 = vunpack.c.l.b16 %v677
        %v894 = vunpack.c.h.b16 %v677
        %v895 = vunpack.c.l.b16 %v678
        %v896 = vunpack.c.l.b16 %v679
        %v897 = vunpack.c.h.b16 %v679
        %v898 = vunpack.c.l.b16 %v680
        %v899 = vunpack.c.l.b16 %v681
        %v900 = vunpack.c.h.b16 %v681
        %v901 = vunpack.c.l.b16 %v682
        %v902 = vunpack.c.l.b16 %v683
        %v903 = vunpack.c.h.b16 %v683
        %v904 = vunpack.c.l.b16 %v684
        %v905 = vunpack.c.l.b16 %v685
        %v906 = vunpack.c.h.b16 %v685
        %v907 = vunpack.c.l.b16 %v686
        %v908 = vunpack.c.l.b16 %v687
        %v909 = vunpack.c.h.b16 %v687
        %v910 = vunpack.c.l.b16 %v688
        %v911 = vunpack.c.l.b16 %v689
        %v912 = vunpack.c.h.b16 %v689
        %v913 = vunpack.c.l.b16 %v690
        %v914 = vunpack.c.l.b16 %v691
        %v915 = vunpack.c.h.b16 %v691
        %v916 = vunpack.c.l.b16 %v692
        %v917 = vunpack.c.l.b16 %v693
        %v918 = vunpack.c.h.b16 %v693
        %v919 = vunpack.c.l.b16 %v694
        %v920 = vunpack.c.l.b16 %v695
        %v921 = vunpack.c.h.b16 %v695
        %v922 = vunpack.c.l.b16 %v696
        %v923 = vunpack.c.l.b16 %v697
        %v924 = vunpack.c.h.b16 %v697
        %v925 = vunpack.c.l.b16 %v698
        %v926 = vunpack.c.l.b16 %v699
        %v927 = vunpack.c.h.b16 %v699
        %v928 = vunpack.c.l.b16 %v700
        %v929 = vunpack.c.l.b16 %v701
        %v930 = vunpack.c.h.b16 %v701
        %v931 = vunpack.c.l.b16 %v702
        %v932 = vunpack.c.l.b16 %v703
        %v933 = vunpack.c.h.b16 %v703
        %v934 = vunpack.c.l.b16 %v704
        %v935 = vunpack.c.l.b16 %v705
        %v936 = vunpack.c.h.b16 %v705
        %v937 = vunpack.c.l.b16 %v706
        %v938 = vunpack.c.l.b16 %v707
        %v939 = vunpack.c.h.b16 %v707
        %v940 = vunpack.c.l.b16 %v708
        %v941 = vunpack.c.l.b16 %v709
        %v942 = vunpack.c.h.b16 %v709
        %v943 = vunpack.c.l.b16 %v710
        %v944 = vunpack.c.l.b16 %v711
        %v945 = vunpack.c.h.b16 %v711
        %v946 = vunpack.c.l.b16 %v712
        %v947 = vunpack.c.l.b16 %v713
        %v948 = vunpack.c.h.b16 %v713
        %v949 = vunpack.c.l.b16 %v714
        %v950 = vunpack.c.l.b16 %v715
        %v951 = vunpack.c.h.b16 %v715
        %v952 = vunpack.c.l.b16 %v716
        %v953 = vunpack.c.l.b16 %v717
        %v954 = vunpack.c.h.b16 %v717
        %v955 = vunpack.c.l.b16 %v718
        %v956 = vunpack.c.l.b16 %v719
        %v957 = vunpack.c.h.b16 %v719
        %v958 = vunpack.c.l.b16 %v720
        %v959 = vunpack.c.l.b16 %v721
        %v960 = vunpack.c.h.b16 %v721
        %v961 = vunpack.c.l.b16 %v722
        %v962 = vunpack.c.l.b16 %v723
        %v963 = vunpack.c.h.b16 %v723
        %v964 = vunpack.c.l.b16 %v724
        %v965 = vunpack.c.l.b16 %v725
        %v966 = vunpack.c.h.b16 %v725
        %v967 = vunpack.c.l.b16 %v726
        %v968 = vunpack.c.l.b16 %v727
        %v969 = vunpack.c.h.b16 %v727
        %v970 = vunpack.c.l.b16 %v728
        %v971 = vunpack.c.l.b16 %v729
        %v972 = vunpack.c.h.b16 %v729
        %v973 = vunpack.c.l.b16 %v730
        %v974 = vunpack.c.l.b16 %v731
        %v975 = vunpack.c.h.b16 %v731
        %v976 = vunpack.c.l.b16 %v732
        %v977 = vunpack.c.l.b16 %v733
        %v978 = vunpack.c.h.b16 %v733
        %v979 = vunpack.c.l.b16 %v734
        %v980 = vunpack.c.l.b16 %v735
        %v981 = vunpack.c.h.b16 %v735
        %v982 = vunpack.c.l.b16 %v736
        %v983 = vunpack.c.l.b16 %v737
        %v984 = vunpack.c.h.b16 %v737
        %v985 = vunpack.c.l.b16 %v738
        %v986 = vunpack.c.l.b16 %v739
        %v987 = vunpack.c.h.b16 %v739
        %v988 = vunpack.c.l.b16 %v740
        %v989 = vpack.c.b16 %v848, %v845
        %v990 = vpack.c.b16 %v849, %v846
        %v991 = vpack.c.b16 %v850, %v847
        %v992 = vpack.c.b16 %v854, %v851
        %v993 = vpack.c.b16 %v855, %v852
        %v994 = vpack.c.b16 %v856, %v853
        %v995 = vpack.c.b16 %v860, %v857
        %v996 = vpack.c.b16 %v861, %v858
        %v997 = vpack.c.b16 %v862, %v859
        %v998 = vpack.c.b16 %v866, %v863
        %v999 = vpack.c.b16 %v867, %v864
        %v1000 = vpack.c.b16 %v868, %v865
        %v1001 = vpack.c.b16 %v872, %v869
        %v1002 = vpack.c.b16 %v873, %v870
        %v1003 = vpack.c.b16 %v874, %v871
        %v1004 = vpack.c.b16 %v878, %v875
        %v1005 = vpack.c.b16 %v879, %v876
        %v1006 = vpack.c.b16 %v880, %v877
        %v1007 = vpack.c.b16 %v884, %v881
        %v1008 = vpack.c.b16 %v885, %v882
        %v1009 = vpack.c.b16 %v886, %v883
        %v1010 = vpack.c.b16 %v890, %v887
        %v1011 = vpack.c.b16 %v891, %v888
        %v1012 = vpack.c.b16 %v892, %v889
        %v1013 = vpack.c.b16 %v896, %v893
        %v1014 = vpack.c.b16 %v897, %v894
        %v1015 = vpack.c.b16 %v898, %v895
        %v1016 = vpack.c.b16 %v902, %v899
        %v1017 = vpack.c.b16 %v903, %v900
        %v1018 = vpack.c.b16 %v904, %v901
        %v1019 = vpack.c.b16 %v908, %v905
        %v1020 = vpack.c.b16 %v909, %v906
        %v1021 = vpack.c.b16 %v910, %v907
        %v1022 = vpack.c.b16 %v914, %v911
        %v1023 = vpack.c.b16 %v915, %v912
        %v1024 = vpack.c.b16 %v916, %v913
        %v1025 = vpack.c.b16 %v920, %v917
        %v1026 = vpack.c.b16 %v921, %v918
        %v1027 = vpack.c.b16 %v922, %v919
        %v1028 = vpack.c.b16 %v926, %v923
        %v1029 = vpack.c.b16 %v927, %v924
        %v1030 = vpack.c.b16 %v928, %v925
        %v1031 = vpack.c.b16 %v932, %v929
        %v1032 = vpack.c.b16 %v933, %v930
        %v1033 = vpack.c.b16 %v934, %v931
        %v1034 = vpack.c.b16 %v938, %v935
        %v1035 = vpack.c.b16 %v939, %v936
        %v1036 = vpack.c.b16 %v940, %v937
        %v1037 = vpack.c.b16 %v944, %v941
        %v1038 = vpack.c.b16 %v945, %v942
        %v1039 = vpack.c.b16 %v946, %v943
        %v1040 = vpack.c.b16 %v950, %v947
        %v1041 = vpack.c.b16 %v951, %v948
        %v1042 = vpack.c.b16 %v952, %v949
        %v1043 = vpack.c.b16 %v956, %v953
        %v1044 = vpack.c.b16 %v957, %v954
        %v1045 = vpack.c.b16 %v958, %v955
        %v1046 = vpack.c.b16 %v962, %v959
        %v1047 = vpack.c.b16 %v963, %v960
        %v1048 = vpack.c.b16 %v964, %v961
        %v1049 = vpack.c.b16 %v968, %v965
        %v1050 = vpack.c.b16 %v969, %v966
        %v1051 = vpack.c.b16 %v970, %v967
        %v1052 = vpack.c.b16 %v974, %v971
        %v1053 = vpack.c.b16 %v975, %v972
        %v1054 = vpack.c.b16 %v976, %v973
        %v1055 = vpack.c.b16 %v980, %v977
        %v1056 = vpack.c.b16 %v981, %v978
        %v1057 = vpack.c.b16 %v982, %v979
        %v1058 = vpack.c.b16 %v986, %v983
        %v1059 = vpack.c.b16 %v987, %v984
        %v1060 = vpack.c.b16 %v988, %v985
        %1133 = vmatpush.bf16.msra.mxu0 %v1010
        %1134 = vmatpush.bf16.msra.mxu0 %v1007
        %1135 = vmatpush.bf16.msra.mxu0 %v1004
        %1136 = vmatpush.bf16.msra.mxu0 %v1001
        %1137 = vmatpush.bf16.msra.mxu0 %v998
        %1138 = vmatpush.bf16.msra.mxu0 %v995
        %1139 = vmatpush.bf16.msra.mxu0 %v992
        %1140 = vmatpush.bf16.msra.mxu0 %v989
        %1141 = vmatmul.bf16.gmra.mxu0 %v615
        %v1142 = vpop.f32.mrf.mxu0
        %v1143 = vadd.f32 %v743, %v1142
        %v1144 = vpop.f32.mrf.mxu0
        %v1145 = vadd.f32 %v743, %v1144
        %1146 = vmatmul.bf16.gmra.mxu0 %v618
        %v1147 = vpop.f32.mrf.mxu0
        %v1148 = vadd.f32 %v743, %v1147
        %v1149 = vpop.f32.mrf.mxu0
        %v1150 = vadd.f32 %v743, %v1149
        %1151 = vmatmul.bf16.gmra.mxu0 %v621
        %v1152 = vpop.f32.mrf.mxu0
        %v1153 = vadd.f32 %v743, %v1152
        %v1154 = vpop.f32.mrf.mxu0
        %v1155 = vadd.f32 %v743, %v1154
        %1156 = vmatmul.bf16.gmra.mxu0 %v624
        %v1157 = vpop.f32.mrf.mxu0
        %v1158 = vadd.f32 %v743, %v1157
        %v1159 = vpop.f32.mrf.mxu0
        %v1160 = vadd.f32 %v743, %v1159
        %1161 = vmatmul.bf16.gmra.mxu0 %v627
        %v1162 = vpop.f32.mrf.mxu0
        %v1163 = vadd.f32 %v743, %v1162
        %v1164 = vpop.f32.mrf.mxu0
        %v1165 = vadd.f32 %v743, %v1164
        %1166 = vmatmul.bf16.gmra.mxu0 %v630
        %v1167 = vpop.f32.mrf.mxu0
        %v1168 = vadd.f32 %v743, %v1167
        %v1169 = vpop.f32.mrf.mxu0
        %v1170 = vadd.f32 %v743, %v1169
        %1171 = vmatmul.bf16.gmra.mxu0 %v633
        %v1172 = vpop.f32.mrf.mxu0
        %v1173 = vadd.f32 %v743, %v1172
        %v1174 = vpop.f32.mrf.mxu0
        %v1175 = vadd.f32 %v743, %v1174
        %1176 = vmatmul.bf16.gmra.mxu0 %v636
        %v1177 = vpop.f32.mrf.mxu0
        %v1178 = vadd.f32 %v743, %v1177
        %v1179 = vpop.f32.mrf.mxu0
        %v1180 = vadd.f32 %v743, %v1179
        %1181 = vmatmul.bf16.gmra.mxu0 %v639
        %v1182 = vpop.f32.mrf.mxu0
        %v1183 = vadd.f32 %v743, %v1182
        %v1184 = vpop.f32.mrf.mxu0
        %v1185 = vadd.f32 %v743, %v1184
        %1186 = vmatmul.bf16.gmra.mxu0 %v642
        %v1187 = vpop.f32.mrf.mxu0
        %v1188 = vadd.f32 %v743, %v1187
        %v1189 = vpop.f32.mrf.mxu0
        %1190 = vdwg.mxu0
        %1191 = vmatpush.bf16.msra.mxu0 %v1034
        %1192 = vmatpush.bf16.msra.mxu0 %v1031
        %1193 = vmatpush.bf16.msra.mxu0 %v1028
        %1194 = vmatpush.bf16.msra.mxu0 %v1025
        %1195 = vmatpush.bf16.msra.mxu0 %v1022
        %1196 = vmatpush.bf16.msra.mxu0 %v1019
        %1197 = vmatpush.bf16.msra.mxu0 %v1016
        %1198 = vmatpush.bf16.msra.mxu0 %v1013
        %1199 = vmatmul.bf16.gmra.mxu0 %v616
        %v1200 = vpop.f32.mrf.mxu0
        %v1201 = vadd.f32 %v1143, %v1200
        %v1202 = vpop.f32.mrf.mxu0
        %v1203 = vadd.f32 %v1145, %v1202
        %1204 = vmatmul.bf16.gmra.mxu0 %v619
        %v1205 = vpop.f32.mrf.mxu0
        %v1206 = vadd.f32 %v1148, %v1205
        %v1207 = vpop.f32.mrf.mxu0
        %v1208 = vadd.f32 %v1150, %v1207
        %1209 = vmatmul.bf16.gmra.mxu0 %v622
        %v1210 = vpop.f32.mrf.mxu0
        %v1211 = vadd.f32 %v1153, %v1210
        %v1212 = vpop.f32.mrf.mxu0
        %v1213 = vadd.f32 %v1155, %v1212
        %1214 = vmatmul.bf16.gmra.mxu0 %v625
        %v1215 = vpop.f32.mrf.mxu0
        %v1216 = vadd.f32 %v1158, %v1215
        %v1217 = vpop.f32.mrf.mxu0
        %v1218 = vadd.f32 %v1160, %v1217
        %1219 = vmatmul.bf16.gmra.mxu0 %v628
        %v1220 = vpop.f32.mrf.mxu0
        %v1221 = vadd.f32 %v1163, %v1220
        %v1222 = vpop.f32.mrf.mxu0
        %v1223 = vadd.f32 %v1165, %v1222
        %1224 = vmatmul.bf16.gmra.mxu0 %v631
        %v1225 = vpop.f32.mrf.mxu0
        %v1226 = vadd.f32 %v1168, %v1225
        %v1227 = vpop.f32.mrf.mxu0
        %v1228 = vadd.f32 %v1170, %v1227
        %1229 = vmatmul.bf16.gmra.mxu0 %v634
        %v1230 = vpop.f32.mrf.mxu0
        %v1231 = vadd.f32 %v1173, %v1230
        %v1232 = vpop.f32.mrf.mxu0
        %v1233 = vadd.f32 %v1175, %v1232
        %1234 = vmatmul.bf16.gmra.mxu0 %v637
        %v1235 = vpop.f32.mrf.mxu0
        %v1236 = vadd.f32 %v1178, %v1235
        %v1237 = vpop.f32.mrf.mxu0
        %v1238 = vadd.f32 %v1180, %v1237
        %1239 = vmatmul.bf16.gmra.mxu0 %v640
        %v1240 = vpop.f32.mrf.mxu0
        %v1241 = vadd.f32 %v1183, %v1240
        %v1242 = vpop.f32.mrf.mxu0
        %v1243 = vadd.f32 %v1185, %v1242
        %1244 = vmatmul.bf16.gmra.mxu0 %v643
        %v1245 = vpop.f32.mrf.mxu0
        %v1246 = vadd.f32 %v1188, %v1245
        %v1247 = vpop.f32.mrf.mxu0
        %1248 = vdwg.mxu0
        %1249 = vmatpush.bf16.msra.mxu0 %v1058
        %1250 = vmatpush.bf16.msra.mxu0 %v1055
        %1251 = vmatpush.bf16.msra.mxu0 %v1052
        %1252 = vmatpush.bf16.msra.mxu0 %v1049
        %1253 = vmatpush.bf16.msra.mxu0 %v1046
        %1254 = vmatpush.bf16.msra.mxu0 %v1043
        %1255 = vmatpush.bf16.msra.mxu0 %v1040
        %1256 = vmatpush.bf16.msra.mxu0 %v1037
        %1257 = vmatmul.bf16.gmra.mxu0 %v617
        %v1258 = vpop.f32.mrf.mxu0
        %v1259 = vadd.f32 %v1201, %v1258
        %v1260 = vpop.f32.mrf.mxu0
        %v1261 = vadd.f32 %v1203, %v1260
        %1262 = vmatmul.bf16.gmra.mxu0 %v620
        %v1263 = vpop.f32.mrf.mxu0
        %v1264 = vadd.f32 %v1206, %v1263
        %v1265 = vpop.f32.mrf.mxu0
        %v1266 = vadd.f32 %v1208, %v1265
        %1267 = vmatmul.bf16.gmra.mxu0 %v623
        %v1268 = vpop.f32.mrf.mxu0
        %v1269 = vadd.f32 %v1211, %v1268
        %v1270 = vpop.f32.mrf.mxu0
        %v1271 = vadd.f32 %v1213, %v1270
        %1272 = vmatmul.bf16.gmra.mxu0 %v626
        %v1273 = vpop.f32.mrf.mxu0
        %v1274 = vadd.f32 %v1216, %v1273
        %v1275 = vpop.f32.mrf.mxu0
        %v1276 = vadd.f32 %v1218, %v1275
        %1277 = vmatmul.bf16.gmra.mxu0 %v629
        %v1278 = vpop.f32.mrf.mxu0
        %v1279 = vadd.f32 %v1221, %v1278
        %v1280 = vpop.f32.mrf.mxu0
        %v1281 = vadd.f32 %v1223, %v1280
        %1282 = vmatmul.bf16.gmra.mxu0 %v632
        %v1283 = vpop.f32.mrf.mxu0
        %v1284 = vadd.f32 %v1226, %v1283
        %v1285 = vpop.f32.mrf.mxu0
        %v1286 = vadd.f32 %v1228, %v1285
        %1287 = vmatmul.bf16.gmra.mxu0 %v635
        %v1288 = vpop.f32.mrf.mxu0
        %v1289 = vadd.f32 %v1231, %v1288
        %v1290 = vpop.f32.mrf.mxu0
        %v1291 = vadd.f32 %v1233, %v1290
        %1292 = vmatmul.bf16.gmra.mxu0 %v638
        %v1293 = vpop.f32.mrf.mxu0
        %v1294 = vadd.f32 %v1236, %v1293
        %v1295 = vpop.f32.mrf.mxu0
        %v1296 = vadd.f32 %v1238, %v1295
        %1297 = vmatmul.bf16.gmra.mxu0 %v641
        %v1298 = vpop.f32.mrf.mxu0
        %v1299 = vadd.f32 %v1241, %v1298
        %v1300 = vpop.f32.mrf.mxu0
        %v1301 = vadd.f32 %v1243, %v1300
        %1302 = vmatmul.bf16.gmra.mxu0 %v644
        %v1303 = vpop.f32.mrf.mxu0
        %v1304 = vadd.f32 %v1246, %v1303
        %v1305 = vpop.f32.mrf.mxu0
        %1306 = vdwg.mxu0
        %1307 = vmatpush.bf16.msra.mxu0 %v1011
        %1308 = vmatpush.bf16.msra.mxu0 %v1008
        %1309 = vmatpush.bf16.msra.mxu0 %v1005
        %1310 = vmatpush.bf16.msra.mxu0 %v1002
        %1311 = vmatpush.bf16.msra.mxu0 %v999
        %1312 = vmatpush.bf16.msra.mxu0 %v996
        %1313 = vmatpush.bf16.msra.mxu0 %v993
        %1314 = vmatpush.bf16.msra.mxu0 %v990
        %1315 = vmatmul.bf16.gmra.mxu0 %v615
        %v1316 = vpop.f32.mrf.mxu0
        %v1317 = vadd.f32 %v744, %v1316
        %v1318 = vpop.f32.mrf.mxu0
        %v1319 = vadd.f32 %v744, %v1318
        %1320 = vmatmul.bf16.gmra.mxu0 %v618
        %v1321 = vpop.f32.mrf.mxu0
        %v1322 = vadd.f32 %v744, %v1321
        %v1323 = vpop.f32.mrf.mxu0
        %v1324 = vadd.f32 %v744, %v1323
        %1325 = vmatmul.bf16.gmra.mxu0 %v621
        %v1326 = vpop.f32.mrf.mxu0
        %v1327 = vadd.f32 %v744, %v1326
        %v1328 = vpop.f32.mrf.mxu0
        %v1329 = vadd.f32 %v744, %v1328
        %1330 = vmatmul.bf16.gmra.mxu0 %v624
        %v1331 = vpop.f32.mrf.mxu0
        %v1332 = vadd.f32 %v744, %v1331
        %v1333 = vpop.f32.mrf.mxu0
        %v1334 = vadd.f32 %v744, %v1333
        %1335 = vmatmul.bf16.gmra.mxu0 %v627
        %v1336 = vpop.f32.mrf.mxu0
        %v1337 = vadd.f32 %v744, %v1336
        %v1338 = vpop.f32.mrf.mxu0
        %v1339 = vadd.f32 %v744, %v1338
        %1340 = vmatmul.bf16.gmra.mxu0 %v630
        %v1341 = vpop.f32.mrf.mxu0
        %v1342 = vadd.f32 %v744, %v1341
        %v1343 = vpop.f32.mrf.mxu0
        %v1344 = vadd.f32 %v744, %v1343
        %1345 = vmatmul.bf16.gmra.mxu0 %v633
        %v1346 = vpop.f32.mrf.mxu0
        %v1347 = vadd.f32 %v744, %v1346
        %v1348 = vpop.f32.mrf.mxu0
        %v1349 = vadd.f32 %v744, %v1348
        %1350 = vmatmul.bf16.gmra.mxu0 %v636
        %v1351 = vpop.f32.mrf.mxu0
        %v1352 = vadd.f32 %v744, %v1351
        %v1353 = vpop.f32.mrf.mxu0
        %v1354 = vadd.f32 %v744, %v1353
        %1355 = vmatmul.bf16.gmra.mxu0 %v639
        %v1356 = vpop.f32.mrf.mxu0
        %v1357 = vadd.f32 %v744, %v1356
        %v1358 = vpop.f32.mrf.mxu0
        %v1359 = vadd.f32 %v744, %v1358
        %1360 = vmatmul.bf16.gmra.mxu0 %v642
        %v1361 = vpop.f32.mrf.mxu0
        %v1362 = vadd.f32 %v744, %v1361
        %v1363 = vpop.f32.mrf.mxu0
        %1364 = vdwg.mxu0
        %1365 = vmatpush.bf16.msra.mxu0 %v1035
        %1366 = vmatpush.bf16.msra.mxu0 %v1032
        %1367 = vmatpush.bf16.msra.mxu0 %v1029
        %1368 = vmatpush.bf16.msra.mxu0 %v1026
        %1369 = vmatpush.bf16.msra.mxu0 %v1023
        %1370 = vmatpush.bf16.msra.mxu0 %v1020
        %1371 = vmatpush.bf16.msra.mxu0 %v1017
        %1372 = vmatpush.bf16.msra.mxu0 %v1014
        %1373 = vmatmul.bf16.gmra.mxu0 %v616
        %v1374 = vpop.f32.mrf.mxu0
        %v1375 = vadd.f32 %v1317, %v1374
        %v1376 = vpop.f32.mrf.mxu0
        %v1377 = vadd.f32 %v1319, %v1376
        %1378 = vmatmul.bf16.gmra.mxu0 %v619
        %v1379 = vpop.f32.mrf.mxu0
        %v1380 = vadd.f32 %v1322, %v1379
        %v1381 = vpop.f32.mrf.mxu0
        %v1382 = vadd.f32 %v1324, %v1381
        %1383 = vmatmul.bf16.gmra.mxu0 %v622
        %v1384 = vpop.f32.mrf.mxu0
        %v1385 = vadd.f32 %v1327, %v1384
        %v1386 = vpop.f32.mrf.mxu0
        %v1387 = vadd.f32 %v1329, %v1386
        %1388 = vmatmul.bf16.gmra.mxu0 %v625
        %v1389 = vpop.f32.mrf.mxu0
        %v1390 = vadd.f32 %v1332, %v1389
        %v1391 = vpop.f32.mrf.mxu0
        %v1392 = vadd.f32 %v1334, %v1391
        %1393 = vmatmul.bf16.gmra.mxu0 %v628
        %v1394 = vpop.f32.mrf.mxu0
        %v1395 = vadd.f32 %v1337, %v1394
        %v1396 = vpop.f32.mrf.mxu0
        %v1397 = vadd.f32 %v1339, %v1396
        %1398 = vmatmul.bf16.gmra.mxu0 %v631
        %v1399 = vpop.f32.mrf.mxu0
        %v1400 = vadd.f32 %v1342, %v1399
        %v1401 = vpop.f32.mrf.mxu0
        %v1402 = vadd.f32 %v1344, %v1401
        %1403 = vmatmul.bf16.gmra.mxu0 %v634
        %v1404 = vpop.f32.mrf.mxu0
        %v1405 = vadd.f32 %v1347, %v1404
        %v1406 = vpop.f32.mrf.mxu0
        %v1407 = vadd.f32 %v1349, %v1406
        %1408 = vmatmul.bf16.gmra.mxu0 %v637
        %v1409 = vpop.f32.mrf.mxu0
        %v1410 = vadd.f32 %v1352, %v1409
        %v1411 = vpop.f32.mrf.mxu0
        %v1412 = vadd.f32 %v1354, %v1411
        %1413 = vmatmul.bf16.gmra.mxu0 %v640
        %v1414 = vpop.f32.mrf.mxu0
        %v1415 = vadd.f32 %v1357, %v1414
        %v1416 = vpop.f32.mrf.mxu0
        %v1417 = vadd.f32 %v1359, %v1416
        %1418 = vmatmul.bf16.gmra.mxu0 %v643
        %v1419 = vpop.f32.mrf.mxu0
        %v1420 = vadd.f32 %v1362, %v1419
        %v1421 = vpop.f32.mrf.mxu0
        %1422 = vdwg.mxu0
        %1423 = vmatpush.bf16.msra.mxu0 %v1059
        %1424 = vmatpush.bf16.msra.mxu0 %v1056
        %1425 = vmatpush.bf16.msra.mxu0 %v1053
        %1426 = vmatpush.bf16.msra.mxu0 %v1050
        %1427 = vmatpush.bf16.msra.mxu0 %v1047
        %1428 = vmatpush.bf16.msra.mxu0 %v1044
        %1429 = vmatpush.bf16.msra.mxu0 %v1041
        %1430 = vmatpush.bf16.msra.mxu0 %v1038
        %1431 = vmatmul.bf16.gmra.mxu0 %v617
        %v1432 = vpop.f32.mrf.mxu0
        %v1433 = vadd.f32 %v1375, %v1432
        %v1434 = vpop.f32.mrf.mxu0
        %v1435 = vadd.f32 %v1377, %v1434
        %1436 = vmatmul.bf16.gmra.mxu0 %v620
        %v1437 = vpop.f32.mrf.mxu0
        %v1438 = vadd.f32 %v1380, %v1437
        %v1439 = vpop.f32.mrf.mxu0
        %v1440 = vadd.f32 %v1382, %v1439
        %1441 = vmatmul.bf16.gmra.mxu0 %v623
        %v1442 = vpop.f32.mrf.mxu0
        %v1443 = vadd.f32 %v1385, %v1442
        %v1444 = vpop.f32.mrf.mxu0
        %v1445 = vadd.f32 %v1387, %v1444
        %1446 = vmatmul.bf16.gmra.mxu0 %v626
        %v1447 = vpop.f32.mrf.mxu0
        %v1448 = vadd.f32 %v1390, %v1447
        %v1449 = vpop.f32.mrf.mxu0
        %v1450 = vadd.f32 %v1392, %v1449
        %1451 = vmatmul.bf16.gmra.mxu0 %v629
        %v1452 = vpop.f32.mrf.mxu0
        %v1453 = vadd.f32 %v1395, %v1452
        %v1454 = vpop.f32.mrf.mxu0
        %v1455 = vadd.f32 %v1397, %v1454
        %1456 = vmatmul.bf16.gmra.mxu0 %v632
        %v1457 = vpop.f32.mrf.mxu0
        %v1458 = vadd.f32 %v1400, %v1457
        %v1459 = vpop.f32.mrf.mxu0
        %v1460 = vadd.f32 %v1402, %v1459
        %1461 = vmatmul.bf16.gmra.mxu0 %v635
        %v1462 = vpop.f32.mrf.mxu0
        %v1463 = vadd.f32 %v1405, %v1462
        %v1464 = vpop.f32.mrf.mxu0
        %v1465 = vadd.f32 %v1407, %v1464
        %1466 = vmatmul.bf16.gmra.mxu0 %v638
        %v1467 = vpop.f32.mrf.mxu0
        %v1468 = vadd.f32 %v1410, %v1467
        %v1469 = vpop.f32.mrf.mxu0
        %v1470 = vadd.f32 %v1412, %v1469
        %1471 = vmatmul.bf16.gmra.mxu0 %v641
        %v1472 = vpop.f32.mrf.mxu0
        %v1473 = vadd.f32 %v1415, %v1472
        %v1474 = vpop.f32.mrf.mxu0
        %v1475 = vadd.f32 %v1417, %v1474
        %1476 = vmatmul.bf16.gmra.mxu0 %v644
        %v1477 = vpop.f32.mrf.mxu0
        %v1478 = vadd.f32 %v1420, %v1477
        %v1479 = vpop.f32.mrf.mxu0
        %1480 = vdwg.mxu0
        %1481 = vmatpush.bf16.msra.mxu0 %v1012
        %1482 = vmatpush.bf16.msra.mxu0 %v1009
        %1483 = vmatpush.bf16.msra.mxu0 %v1006
        %1484 = vmatpush.bf16.msra.mxu0 %v1003
        %1485 = vmatpush.bf16.msra.mxu0 %v1000
        %1486 = vmatpush.bf16.msra.mxu0 %v997
        %1487 = vmatpush.bf16.msra.mxu0 %v994
        %1488 = vmatpush.bf16.msra.mxu0 %v991
        %1489 = vmatmul.bf16.gmra.mxu0 %v615
        %v1490 = vpop.f32.mrf.mxu0
        %v1491 = vadd.f32 %v745, %v1490
        %v1492 = vpop.f32.mrf.mxu0
        %v1493 = vadd.f32 %v745, %v1492
        %1494 = vmatmul.bf16.gmra.mxu0 %v618
        %v1495 = vpop.f32.mrf.mxu0
        %v1496 = vadd.f32 %v745, %v1495
        %v1497 = vpop.f32.mrf.mxu0
        %v1498 = vadd.f32 %v745, %v1497
        %1499 = vmatmul.bf16.gmra.mxu0 %v621
        %v1500 = vpop.f32.mrf.mxu0
        %v1501 = vadd.f32 %v745, %v1500
        %v1502 = vpop.f32.mrf.mxu0
        %v1503 = vadd.f32 %v745, %v1502
        %1504 = vmatmul.bf16.gmra.mxu0 %v624
        %v1505 = vpop.f32.mrf.mxu0
        %v1506 = vadd.f32 %v745, %v1505
        %v1507 = vpop.f32.mrf.mxu0
        %v1508 = vadd.f32 %v745, %v1507
        %1509 = vmatmul.bf16.gmra.mxu0 %v627
        %v1510 = vpop.f32.mrf.mxu0
        %v1511 = vadd.f32 %v745, %v1510
        %v1512 = vpop.f32.mrf.mxu0
        %v1513 = vadd.f32 %v745, %v1512
        %1514 = vmatmul.bf16.gmra.mxu0 %v630
        %v1515 = vpop.f32.mrf.mxu0
        %v1516 = vadd.f32 %v745, %v1515
        %v1517 = vpop.f32.mrf.mxu0
        %v1518 = vadd.f32 %v745, %v1517
        %1519 = vmatmul.bf16.gmra.mxu0 %v633
        %v1520 = vpop.f32.mrf.mxu0
        %v1521 = vadd.f32 %v745, %v1520
        %v1522 = vpop.f32.mrf.mxu0
        %v1523 = vadd.f32 %v745, %v1522
        %1524 = vmatmul.bf16.gmra.mxu0 %v636
        %v1525 = vpop.f32.mrf.mxu0
        %v1526 = vadd.f32 %v745, %v1525
        %v1527 = vpop.f32.mrf.mxu0
        %v1528 = vadd.f32 %v745, %v1527
        %1529 = vmatmul.bf16.gmra.mxu0 %v639
        %v1530 = vpop.f32.mrf.mxu0
        %v1531 = vadd.f32 %v745, %v1530
        %v1532 = vpop.f32.mrf.mxu0
        %v1533 = vadd.f32 %v745, %v1532
        %1534 = vmatmul.bf16.gmra.mxu0 %v642
        %v1535 = vpop.f32.mrf.mxu0
        %v1536 = vadd.f32 %v745, %v1535
        %v1537 = vpop.f32.mrf.mxu0
        %1538 = vdwg.mxu0
        %1539 = vmatpush.bf16.msra.mxu0 %v1036
        %1540 = vmatpush.bf16.msra.mxu0 %v1033
        %1541 = vmatpush.bf16.msra.mxu0 %v1030
        %1542 = vmatpush.bf16.msra.mxu0 %v1027
        %1543 = vmatpush.bf16.msra.mxu0 %v1024
        %1544 = vmatpush.bf16.msra.mxu0 %v1021
        %1545 = vmatpush.bf16.msra.mxu0 %v1018
        %1546 = vmatpush.bf16.msra.mxu0 %v1015
        %1547 = vmatmul.bf16.gmra.mxu0 %v616
        %v1548 = vpop.f32.mrf.mxu0
        %v1549 = vadd.f32 %v1491, %v1548
        %v1550 = vpop.f32.mrf.mxu0
        %v1551 = vadd.f32 %v1493, %v1550
        %1552 = vmatmul.bf16.gmra.mxu0 %v619
        %v1553 = vpop.f32.mrf.mxu0
        %v1554 = vadd.f32 %v1496, %v1553
        %v1555 = vpop.f32.mrf.mxu0
        %v1556 = vadd.f32 %v1498, %v1555
        %1557 = vmatmul.bf16.gmra.mxu0 %v622
        %v1558 = vpop.f32.mrf.mxu0
        %v1559 = vadd.f32 %v1501, %v1558
        %v1560 = vpop.f32.mrf.mxu0
        %v1561 = vadd.f32 %v1503, %v1560
        %1562 = vmatmul.bf16.gmra.mxu0 %v625
        %v1563 = vpop.f32.mrf.mxu0
        %v1564 = vadd.f32 %v1506, %v1563
        %v1565 = vpop.f32.mrf.mxu0
        %v1566 = vadd.f32 %v1508, %v1565
        %1567 = vmatmul.bf16.gmra.mxu0 %v628
        %v1568 = vpop.f32.mrf.mxu0
        %v1569 = vadd.f32 %v1511, %v1568
        %v1570 = vpop.f32.mrf.mxu0
        %v1571 = vadd.f32 %v1513, %v1570
        %1572 = vmatmul.bf16.gmra.mxu0 %v631
        %v1573 = vpop.f32.mrf.mxu0
        %v1574 = vadd.f32 %v1516, %v1573
        %v1575 = vpop.f32.mrf.mxu0
        %v1576 = vadd.f32 %v1518, %v1575
        %1577 = vmatmul.bf16.gmra.mxu0 %v634
        %v1578 = vpop.f32.mrf.mxu0
        %v1579 = vadd.f32 %v1521, %v1578
        %v1580 = vpop.f32.mrf.mxu0
        %v1581 = vadd.f32 %v1523, %v1580
        %1582 = vmatmul.bf16.gmra.mxu0 %v637
        %v1583 = vpop.f32.mrf.mxu0
        %v1584 = vadd.f32 %v1526, %v1583
        %v1585 = vpop.f32.mrf.mxu0
        %v1586 = vadd.f32 %v1528, %v1585
        %1587 = vmatmul.bf16.gmra.mxu0 %v640
        %v1588 = vpop.f32.mrf.mxu0
        %v1589 = vadd.f32 %v1531, %v1588
        %v1590 = vpop.f32.mrf.mxu0
        %v1591 = vadd.f32 %v1533, %v1590
        %1592 = vmatmul.bf16.gmra.mxu0 %v643
        %v1593 = vpop.f32.mrf.mxu0
        %v1594 = vadd.f32 %v1536, %v1593
        %v1595 = vpop.f32.mrf.mxu0
        %1596 = vdwg.mxu0
        %1597 = vmatpush.bf16.msra.mxu0 %v1060
        %1598 = vmatpush.bf16.msra.mxu0 %v1057
        %1599 = vmatpush.bf16.msra.mxu0 %v1054
        %1600 = vmatpush.bf16.msra.mxu0 %v1051
        %1601 = vmatpush.bf16.msra.mxu0 %v1048
        %1602 = vmatpush.bf16.msra.mxu0 %v1045
        %1603 = vmatpush.bf16.msra.mxu0 %v1042
        %1604 = vmatpush.bf16.msra.mxu0 %v1039
        %1605 = vmatmul.bf16.gmra.mxu0 %v617
        %v1606 = vpop.f32.mrf.mxu0
        %v1607 = vadd.f32 %v1549, %v1606
        %v1608 = vpop.f32.mrf.mxu0
        %v1609 = vadd.f32 %v1551, %v1608
        %1610 = vmatmul.bf16.gmra.mxu0 %v620
        %v1611 = vpop.f32.mrf.mxu0
        %v1612 = vadd.f32 %v1554, %v1611
        %v1613 = vpop.f32.mrf.mxu0
        %v1614 = vadd.f32 %v1556, %v1613
        %1615 = vmatmul.bf16.gmra.mxu0 %v623
        %v1616 = vpop.f32.mrf.mxu0
        %v1617 = vadd.f32 %v1559, %v1616
        %v1618 = vpop.f32.mrf.mxu0
        %v1619 = vadd.f32 %v1561, %v1618
        %1620 = vmatmul.bf16.gmra.mxu0 %v626
        %v1621 = vpop.f32.mrf.mxu0
        %v1622 = vadd.f32 %v1564, %v1621
        %v1623 = vpop.f32.mrf.mxu0
        %v1624 = vadd.f32 %v1566, %v1623
        %1625 = vmatmul.bf16.gmra.mxu0 %v629
        %v1626 = vpop.f32.mrf.mxu0
        %v1627 = vadd.f32 %v1569, %v1626
        %v1628 = vpop.f32.mrf.mxu0
        %v1629 = vadd.f32 %v1571, %v1628
        %1630 = vmatmul.bf16.gmra.mxu0 %v632
        %v1631 = vpop.f32.mrf.mxu0
        %v1632 = vadd.f32 %v1574, %v1631
        %v1633 = vpop.f32.mrf.mxu0
        %v1634 = vadd.f32 %v1576, %v1633
        %1635 = vmatmul.bf16.gmra.mxu0 %v635
        %v1636 = vpop.f32.mrf.mxu0
        %v1637 = vadd.f32 %v1579, %v1636
        %v1638 = vpop.f32.mrf.mxu0
        %v1639 = vadd.f32 %v1581, %v1638
        %1640 = vmatmul.bf16.gmra.mxu0 %v638
        %v1641 = vpop.f32.mrf.mxu0
        %v1642 = vadd.f32 %v1584, %v1641
        %v1643 = vpop.f32.mrf.mxu0
        %v1644 = vadd.f32 %v1586, %v1643
        %1645 = vmatmul.bf16.gmra.mxu0 %v641
        %v1646 = vpop.f32.mrf.mxu0
        %v1647 = vadd.f32 %v1589, %v1646
        %v1648 = vpop.f32.mrf.mxu0
        %v1649 = vadd.f32 %v1591, %v1648
        %1650 = vmatmul.bf16.gmra.mxu0 %v644
        %v1651 = vpop.f32.mrf.mxu0
        %v1652 = vadd.f32 %v1594, %v1651
        %v1653 = vpop.f32.mrf.mxu0
        %1654 = vdwg.mxu0
        %v1655 = vmax.f32 %v1259, 0.0
        %v1656 = vmax.f32 %v1433, 0.0
        %v1657 = vmax.f32 %v1607, 0.0
        %v1658 = vmax.f32 %v1261, 0.0
        %v1659 = vmax.f32 %v1435, 0.0
        %v1660 = vmax.f32 %v1609, 0.0
        %v1661 = vmax.f32 %v1264, 0.0
        %v1662 = vmax.f32 %v1438, 0.0
        %v1663 = vmax.f32 %v1612, 0.0
        %v1664 = vmax.f32 %v1266, 0.0
        %v1665 = vmax.f32 %v1440, 0.0
        %v1666 = vmax.f32 %v1614, 0.0
        %v1667 = vmax.f32 %v1269, 0.0
        %v1668 = vmax.f32 %v1443, 0.0
        %v1669 = vmax.f32 %v1617, 0.0
        %v1670 = vmax.f32 %v1271, 0.0
        %v1671 = vmax.f32 %v1445, 0.0
        %v1672 = vmax.f32 %v1619, 0.0
        %v1673 = vmax.f32 %v1274, 0.0
        %v1674 = vmax.f32 %v1448, 0.0
        %v1675 = vmax.f32 %v1622, 0.0
        %v1676 = vmax.f32 %v1276, 0.0
        %v1677 = vmax.f32 %v1450, 0.0
        %v1678 = vmax.f32 %v1624, 0.0
        %v1679 = vmax.f32 %v1279, 0.0
        %v1680 = vmax.f32 %v1453, 0.0
        %v1681 = vmax.f32 %v1627, 0.0
        %v1682 = vmax.f32 %v1281, 0.0
        %v1683 = vmax.f32 %v1455, 0.0
        %v1684 = vmax.f32 %v1629, 0.0
        %v1685 = vmax.f32 %v1284, 0.0
        %v1686 = vmax.f32 %v1458, 0.0
        %v1687 = vmax.f32 %v1632, 0.0
        %v1688 = vmax.f32 %v1286, 0.0
        %v1689 = vmax.f32 %v1460, 0.0
        %v1690 = vmax.f32 %v1634, 0.0
        %v1691 = vmax.f32 %v1289, 0.0
        %v1692 = vmax.f32 %v1463, 0.0
        %v1693 = vmax.f32 %v1637, 0.0
        %v1694 = vmax.f32 %v1291, 0.0
        %v1695 = vmax.f32 %v1465, 0.0
        %v1696 = vmax.f32 %v1639, 0.0
        %v1697 = vmax.f32 %v1294, 0.0
        %v1698 = vmax.f32 %v1468, 0.0
        %v1699 = vmax.f32 %v1642, 0.0
        %v1700 = vmax.f32 %v1296, 0.0
        %v1701 = vmax.f32 %v1470, 0.0
        %v1702 = vmax.f32 %v1644, 0.0
        %v1703 = vmax.f32 %v1299, 0.0
        %v1704 = vmax.f32 %v1473, 0.0
        %v1705 = vmax.f32 %v1647, 0.0
        %v1706 = vmax.f32 %v1301, 0.0
        %v1707 = vmax.f32 %v1475, 0.0
        %v1708 = vmax.f32 %v1649, 0.0
        %v1709 = vmax.f32 %v1304, 0.0
        %v1710 = vmax.f32 %v1478, 0.0
        %v1711 = vmax.f32 %v1652, 0.0
        %v1712 = vpack.c.bf16 %v1658, %v1655
        %v1713 = vpack.c.bf16 %v1659, %v1656
        %v1714 = vpack.c.bf16 %v1660, %v1657
        %v1715 = vpack.c.bf16 %v1664, %v1661
        %v1716 = vpack.c.bf16 %v1665, %v1662
        %v1717 = vpack.c.bf16 %v1666, %v1663
        %v1718 = vpack.c.bf16 %v1670, %v1667
        %v1719 = vpack.c.bf16 %v1671, %v1668
        %v1720 = vpack.c.bf16 %v1672, %v1669
        %v1721 = vpack.c.bf16 %v1676, %v1673
        %v1722 = vpack.c.bf16 %v1677, %v1674
        %v1723 = vpack.c.bf16 %v1678, %v1675
        %v1724 = vpack.c.bf16 %v1682, %v1679
        %v1725 = vpack.c.bf16 %v1683, %v1680
        %v1726 = vpack.c.bf16 %v1684, %v1681
        %v1727 = vpack.c.bf16 %v1688, %v1685
        %v1728 = vpack.c.bf16 %v1689, %v1686
        %v1729 = vpack.c.bf16 %v1690, %v1687
        %v1730 = vpack.c.bf16 %v1694, %v1691
        %v1731 = vpack.c.bf16 %v1695, %v1692
        %v1732 = vpack.c.bf16 %v1696, %v1693
        %v1733 = vpack.c.bf16 %v1700, %v1697
        %v1734 = vpack.c.bf16 %v1701, %v1698
        %v1735 = vpack.c.bf16 %v1702, %v1699
        %v1736 = vpack.c.bf16 %v1706, %v1703
        %v1737 = vpack.c.bf16 %v1707, %v1704
        %v1738 = vpack.c.bf16 %v1708, %v1705
        %v1739 = vpack.c.bf16 %v1709, %v1709
        %v1740 = vpack.c.bf16 %v1710, %v1710
        %v1741 = vpack.c.bf16 %v1711, %v1711
        %v1742 = vld [vmem:[#allocation5] sm:$0xff]
        %v1743 = vld [vmem:[#allocation5 + $0x8] sm:$0xf]
        %v1744 = vld [vmem:[#allocation5 + $0xc] sm:$0xff]
        %v1745 = vld [vmem:[#allocation5 + $0x14] sm:$0xf]
        %v1746 = vld [vmem:[#allocation5 + $0x18] sm:$0xff]
        %v1747 = vld [vmem:[#allocation5 + $0x20] sm:$0xf]
        %v1748 = vld [vmem:[#allocation5 + $0x24] sm:$0xff]
        %v1749 = vld [vmem:[#allocation5 + $0x2c] sm:$0xf]
        %v1750 = vld [vmem:[#allocation5 + $0x30] sm:$0xff]
        %v1751 = vld [vmem:[#allocation5 + $0x38] sm:$0xf]
        %v1752 = vld [vmem:[#allocation5 + $0x3c] sm:$0xff]
        %v1753 = vld [vmem:[#allocation5 + $0x44] sm:$0xf]
        %v1754 = vld [vmem:[#allocation5 + $0x48] sm:$0xff]
        %v1755 = vld [vmem:[#allocation5 + $0x50] sm:$0xf]
        %v1756 = vld [vmem:[#allocation5 + $0x54] sm:$0xff]
        %v1757 = vld [vmem:[#allocation5 + $0x5c] sm:$0xf]
        %v1758 = vld [vmem:[#allocation5 + $0x60] sm:$0xff]
        %v1759 = vld [vmem:[#allocation5 + $0x68] sm:$0xf]
        %v1760 = vld [vmem:[#allocation5 + $0x6c] sm:$0xff]
        %v1761 = vld [vmem:[#allocation5 + $0x74] sm:$0xf]
        %v1762 = vld [vmem:[#allocation5 + $0x78] sm:$0xff]
        %v1763 = vld [vmem:[#allocation5 + $0x80] sm:$0xf]
        %v1764 = vld [vmem:[#allocation5 + $0x84] sm:$0xff]
        %v1765 = vld [vmem:[#allocation5 + $0x8c] sm:$0xf]
        %v1766 = vld [vmem:[#allocation5 + $0x90] sm:$0xff]
        %v1767 = vld [vmem:[#allocation5 + $0x98] sm:$0xf]
        %v1768 = vld [vmem:[#allocation5 + $0x9c] sm:$0xff]
        %v1769 = vld [vmem:[#allocation5 + $0xa4] sm:$0xf]
        %v1770 = vld [vmem:[#allocation5 + $0xa8] sm:$0xff]
        %v1771 = vld [vmem:[#allocation5 + $0xb0] sm:$0xf]
        %v1772 = vld [vmem:[#allocation5 + $0xb4] sm:$0xff]
        %v1773 = vld [vmem:[#allocation5 + $0xbc] sm:$0xf]
        %v1774 = vld [vmem:[#allocation5 + $0xc0] sm:$0xff]
        %v1775 = vld [vmem:[#allocation5 + $0xc8] sm:$0xf]
        %v1776 = vld [vmem:[#allocation5 + $0xcc] sm:$0xff]
        %v1777 = vld [vmem:[#allocation5 + $0xd4] sm:$0xf]
        %v1778 = vld [vmem:[#allocation5 + $0xd8] sm:$0xff]
        %v1779 = vld [vmem:[#allocation5 + $0xe0] sm:$0xf]
        %v1780 = vld [vmem:[#allocation5 + $0xe4] sm:$0xff]
        %v1781 = vld [vmem:[#allocation5 + $0xec] sm:$0xf]
        %v1782 = vld [vmem:[#allocation5 + $0xf0] sm:$0xff]
        %v1783 = vld [vmem:[#allocation5 + $0xf8] sm:$0xf]
        %v1784 = vld [vmem:[#allocation5 + $0xfc] sm:$0xff]
        %v1785 = vld [vmem:[#allocation5 + $0x104] sm:$0xf]
        %v1786 = vld [vmem:[#allocation5 + $0x108] sm:$0xff]
        %v1787 = vld [vmem:[#allocation5 + $0x110] sm:$0xf]
        %v1788 = vld [vmem:[#allocation5 + $0x114] sm:$0xff]
        %v1789 = vld [vmem:[#allocation5 + $0x11c] sm:$0xf]
        %v1790 = vld [vmem:[#allocation5 + $0x120] sm:$0xff]
        %v1791 = vld [vmem:[#allocation5 + $0x128] sm:$0xf]
        %v1792 = vld [vmem:[#allocation5 + $0x12c] sm:$0xff]
        %v1793 = vld [vmem:[#allocation5 + $0x134] sm:$0xf]
        %v1794 = vld [vmem:[#allocation5 + $0x138] sm:$0xff]
        %v1795 = vld [vmem:[#allocation5 + $0x140] sm:$0xf]
        %v1796 = vld [vmem:[#allocation5 + $0x144] sm:$0xff]
        %v1797 = vld [vmem:[#allocation5 + $0x14c] sm:$0xf]
        %v1798 = vld [vmem:[#allocation5 + $0x150] sm:$0xff]
        %v1799 = vld [vmem:[#allocation5 + $0x158] sm:$0xf]
        %v1800 = vld [vmem:[#allocation5 + $0x15c] sm:$0xff]
        %v1801 = vld [vmem:[#allocation5 + $0x164] sm:$0xf]
        %v1802 = vld [vmem:[#allocation5 + $0x168] sm:$0xff]
        %v1803 = vld [vmem:[#allocation5 + $0x170] sm:$0xf]
        %v1804 = vld [vmem:[#allocation5 + $0x174] sm:$0xff]
        %v1805 = vld [vmem:[#allocation5 + $0x17c] sm:$0xf]
        %v1806 = vld [vmem:[#allocation5 + $0x180] sm:$0xff]
        %v1807 = vld [vmem:[#allocation5 + $0x188] sm:$0xf]
        %v1808 = vld [vmem:[#allocation5 + $0x18c] sm:$0xff]
        %v1809 = vld [vmem:[#allocation5 + $0x194] sm:$0xf]
        %v1810 = vld [vmem:[#allocation5 + $0x198] sm:$0xff]
        %v1811 = vld [vmem:[#allocation5 + $0x1a0] sm:$0xf]
        %v1812 = vld [vmem:[#allocation5 + $0x1a4] sm:$0xff]
        %v1813 = vld [vmem:[#allocation5 + $0x1ac] sm:$0xf]
        %v1814 = vld [vmem:[#allocation5 + $0x1b0] sm:$0xff]
        %v1815 = vld [vmem:[#allocation5 + $0x1b8] sm:$0xf]
        %v1816 = vld [vmem:[#allocation5 + $0x1bc] sm:$0xff]
        %v1817 = vld [vmem:[#allocation5 + $0x1c4] sm:$0xf]
        %v1818 = vld [vmem:[#allocation5 + $0x1c8] sm:$0xff]
        %v1819 = vld [vmem:[#allocation5 + $0x1d0] sm:$0xf]
        %v1820 = vld [vmem:[#allocation5 + $0x1d4] sm:$0xff]
        %v1821 = vld [vmem:[#allocation5 + $0x1dc] sm:$0xf]
        %v1822 = vld [vmem:[#allocation5 + $0x1e0] sm:$0xff]
        %v1823 = vld [vmem:[#allocation5 + $0x1e8] sm:$0xf]
        %v1824 = vld [vmem:[#allocation5 + $0x1ec] sm:$0xff]
        %v1825 = vld [vmem:[#allocation5 + $0x1f4] sm:$0xf]
        %v1826 = vld [vmem:[#allocation5 + $0x1f8] sm:$0xff]
        %v1827 = vld [vmem:[#allocation5 + $0x200] sm:$0xf]
        %v1828 = vld [vmem:[#allocation5 + $0x204] sm:$0xff]
        %v1829 = vld [vmem:[#allocation5 + $0x20c] sm:$0xf]
        %v1830 = vld [vmem:[#allocation5 + $0x210] sm:$0xff]
        %v1831 = vld [vmem:[#allocation5 + $0x218] sm:$0xf]
        %v1832 = vld [vmem:[#allocation5 + $0x21c] sm:$0xff]
        %v1833 = vld [vmem:[#allocation5 + $0x224] sm:$0xf]
        %v1834 = vld [vmem:[#allocation5 + $0x228] sm:$0xff]
        %v1835 = vld [vmem:[#allocation5 + $0x230] sm:$0xf]
        %v1836 = vld [vmem:[#allocation5 + $0x234] sm:$0xff]
        %v1837 = vld [vmem:[#allocation5 + $0x23c] sm:$0xf]
        %v1838 = vld [vmem:[%s6] sm:$0x7]
        %v1840 = vperm.slane %v1838, 0
        %v1841 = vperm.slane %v1838, 1
        %v1842 = vperm.slane %v1838, 2
        %v1942 = vunpack.c.l.b16 %v1742
        %v1943 = vunpack.c.h.b16 %v1742
        %v1944 = vunpack.c.l.b16 %v1743
        %v1945 = vunpack.c.l.b16 %v1744
        %v1946 = vunpack.c.h.b16 %v1744
        %v1947 = vunpack.c.l.b16 %v1745
        %v1948 = vunpack.c.l.b16 %v1746
        %v1949 = vunpack.c.h.b16 %v1746
        %v1950 = vunpack.c.l.b16 %v1747
        %v1951 = vunpack.c.l.b16 %v1748
        %v1952 = vunpack.c.h.b16 %v1748
        %v1953 = vunpack.c.l.b16 %v1749
        %v1954 = vunpack.c.l.b16 %v1750
        %v1955 = vunpack.c.h.b16 %v1750
        %v1956 = vunpack.c.l.b16 %v1751
        %v1957 = vunpack.c.l.b16 %v1752
        %v1958 = vunpack.c.h.b16 %v1752
        %v1959 = vunpack.c.l.b16 %v1753
        %v1960 = vunpack.c.l.b16 %v1754
        %v1961 = vunpack.c.h.b16 %v1754
        %v1962 = vunpack.c.l.b16 %v1755
        %v1963 = vunpack.c.l.b16 %v1756
        %v1964 = vunpack.c.h.b16 %v1756
        %v1965 = vunpack.c.l.b16 %v1757
        %v1966 = vunpack.c.l.b16 %v1758
        %v1967 = vunpack.c.h.b16 %v1758
        %v1968 = vunpack.c.l.b16 %v1759
        %v1969 = vunpack.c.l.b16 %v1760
        %v1970 = vunpack.c.h.b16 %v1760
        %v1971 = vunpack.c.l.b16 %v1761
        %v1972 = vunpack.c.l.b16 %v1762
        %v1973 = vunpack.c.h.b16 %v1762
        %v1974 = vunpack.c.l.b16 %v1763
        %v1975 = vunpack.c.l.b16 %v1764
        %v1976 = vunpack.c.h.b16 %v1764
        %v1977 = vunpack.c.l.b16 %v1765
        %v1978 = vunpack.c.l.b16 %v1766
        %v1979 = vunpack.c.h.b16 %v1766
        %v1980 = vunpack.c.l.b16 %v1767
        %v1981 = vunpack.c.l.b16 %v1768
        %v1982 = vunpack.c.h.b16 %v1768
        %v1983 = vunpack.c.l.b16 %v1769
        %v1984 = vunpack.c.l.b16 %v1770
        %v1985 = vunpack.c.h.b16 %v1770
        %v1986 = vunpack.c.l.b16 %v1771
        %v1987 = vunpack.c.l.b16 %v1772
        %v1988 = vunpack.c.h.b16 %v1772
        %v1989 = vunpack.c.l.b16 %v1773
        %v1990 = vunpack.c.l.b16 %v1774
        %v1991 = vunpack.c.h.b16 %v1774
        %v1992 = vunpack.c.l.b16 %v1775
        %v1993 = vunpack.c.l.b16 %v1776
        %v1994 = vunpack.c.h.b16 %v1776
        %v1995 = vunpack.c.l.b16 %v1777
        %v1996 = vunpack.c.l.b16 %v1778
        %v1997 = vunpack.c.h.b16 %v1778
        %v1998 = vunpack.c.l.b16 %v1779
        %v1999 = vunpack.c.l.b16 %v1780
        %v2000 = vunpack.c.h.b16 %v1780
        %v2001 = vunpack.c.l.b16 %v1781
        %v2002 = vunpack.c.l.b16 %v1782
        %v2003 = vunpack.c.h.b16 %v1782
        %v2004 = vunpack.c.l.b16 %v1783
        %v2005 = vunpack.c.l.b16 %v1784
        %v2006 = vunpack.c.h.b16 %v1784
        %v2007 = vunpack.c.l.b16 %v1785
        %v2008 = vunpack.c.l.b16 %v1786
        %v2009 = vunpack.c.h.b16 %v1786
        %v2010 = vunpack.c.l.b16 %v1787
        %v2011 = vunpack.c.l.b16 %v1788
        %v2012 = vunpack.c.h.b16 %v1788
        %v2013 = vunpack.c.l.b16 %v1789
        %v2014 = vunpack.c.l.b16 %v1790
        %v2015 = vunpack.c.h.b16 %v1790
        %v2016 = vunpack.c.l.b16 %v1791
        %v2017 = vunpack.c.l.b16 %v1792
        %v2018 = vunpack.c.h.b16 %v1792
        %v2019 = vunpack.c.l.b16 %v1793
        %v2020 = vunpack.c.l.b16 %v1794
        %v2021 = vunpack.c.h.b16 %v1794
        %v2022 = vunpack.c.l.b16 %v1795
        %v2023 = vunpack.c.l.b16 %v1796
        %v2024 = vunpack.c.h.b16 %v1796
        %v2025 = vunpack.c.l.b16 %v1797
        %v2026 = vunpack.c.l.b16 %v1798
        %v2027 = vunpack.c.h.b16 %v1798
        %v2028 = vunpack.c.l.b16 %v1799
        %v2029 = vunpack.c.l.b16 %v1800
        %v2030 = vunpack.c.h.b16 %v1800
        %v2031 = vunpack.c.l.b16 %v1801
        %v2032 = vunpack.c.l.b16 %v1802
        %v2033 = vunpack.c.h.b16 %v1802
        %v2034 = vunpack.c.l.b16 %v1803
        %v2035 = vunpack.c.l.b16 %v1804
        %v2036 = vunpack.c.h.b16 %v1804
        %v2037 = vunpack.c.l.b16 %v1805
        %v2038 = vunpack.c.l.b16 %v1806
        %v2039 = vunpack.c.h.b16 %v1806
        %v2040 = vunpack.c.l.b16 %v1807
        %v2041 = vunpack.c.l.b16 %v1808
        %v2042 = vunpack.c.h.b16 %v1808
        %v2043 = vunpack.c.l.b16 %v1809
        %v2044 = vunpack.c.l.b16 %v1810
        %v2045 = vunpack.c.h.b16 %v1810
        %v2046 = vunpack.c.l.b16 %v1811
        %v2047 = vunpack.c.l.b16 %v1812
        %v2048 = vunpack.c.h.b16 %v1812
        %v2049 = vunpack.c.l.b16 %v1813
        %v2050 = vunpack.c.l.b16 %v1814
        %v2051 = vunpack.c.h.b16 %v1814
        %v2052 = vunpack.c.l.b16 %v1815
        %v2053 = vunpack.c.l.b16 %v1816
        %v2054 = vunpack.c.h.b16 %v1816
        %v2055 = vunpack.c.l.b16 %v1817
        %v2056 = vunpack.c.l.b16 %v1818
        %v2057 = vunpack.c.h.b16 %v1818
        %v2058 = vunpack.c.l.b16 %v1819
        %v2059 = vunpack.c.l.b16 %v1820
        %v2060 = vunpack.c.h.b16 %v1820
        %v2061 = vunpack.c.l.b16 %v1821
        %v2062 = vunpack.c.l.b16 %v1822
        %v2063 = vunpack.c.h.b16 %v1822
        %v2064 = vunpack.c.l.b16 %v1823
        %v2065 = vunpack.c.l.b16 %v1824
        %v2066 = vunpack.c.h.b16 %v1824
        %v2067 = vunpack.c.l.b16 %v1825
        %v2068 = vunpack.c.l.b16 %v1826
        %v2069 = vunpack.c.h.b16 %v1826
        %v2070 = vunpack.c.l.b16 %v1827
        %v2071 = vunpack.c.l.b16 %v1828
        %v2072 = vunpack.c.h.b16 %v1828
        %v2073 = vunpack.c.l.b16 %v1829
        %v2074 = vunpack.c.l.b16 %v1830
        %v2075 = vunpack.c.h.b16 %v1830
        %v2076 = vunpack.c.l.b16 %v1831
        %v2077 = vunpack.c.l.b16 %v1832
        %v2078 = vunpack.c.h.b16 %v1832
        %v2079 = vunpack.c.l.b16 %v1833
        %v2080 = vunpack.c.l.b16 %v1834
        %v2081 = vunpack.c.h.b16 %v1834
        %v2082 = vunpack.c.l.b16 %v1835
        %v2083 = vunpack.c.l.b16 %v1836
        %v2084 = vunpack.c.h.b16 %v1836
        %v2085 = vunpack.c.l.b16 %v1837
        %v2086 = vpack.c.b16 %v1945, %v1942
        %v2087 = vpack.c.b16 %v1946, %v1943
        %v2088 = vpack.c.b16 %v1947, %v1944
        %v2089 = vpack.c.b16 %v1951, %v1948
        %v2090 = vpack.c.b16 %v1952, %v1949
        %v2091 = vpack.c.b16 %v1953, %v1950
        %v2092 = vpack.c.b16 %v1957, %v1954
        %v2093 = vpack.c.b16 %v1958, %v1955
        %v2094 = vpack.c.b16 %v1959, %v1956
        %v2095 = vpack.c.b16 %v1963, %v1960
        %v2096 = vpack.c.b16 %v1964, %v1961
        %v2097 = vpack.c.b16 %v1965, %v1962
        %v2098 = vpack.c.b16 %v1969, %v1966
        %v2099 = vpack.c.b16 %v1970, %v1967
        %v2100 = vpack.c.b16 %v1971, %v1968
        %v2101 = vpack.c.b16 %v1975, %v1972
        %v2102 = vpack.c.b16 %v1976, %v1973
        %v2103 = vpack.c.b16 %v1977, %v1974
        %v2104 = vpack.c.b16 %v1981, %v1978
        %v2105 = vpack.c.b16 %v1982, %v1979
        %v2106 = vpack.c.b16 %v1983, %v1980
        %v2107 = vpack.c.b16 %v1987, %v1984
        %v2108 = vpack.c.b16 %v1988, %v1985
        %v2109 = vpack.c.b16 %v1989, %v1986
        %v2110 = vpack.c.b16 %v1993, %v1990
        %v2111 = vpack.c.b16 %v1994, %v1991
        %v2112 = vpack.c.b16 %v1995, %v1992
        %v2113 = vpack.c.b16 %v1999, %v1996
        %v2114 = vpack.c.b16 %v2000, %v1997
        %v2115 = vpack.c.b16 %v2001, %v1998
        %v2116 = vpack.c.b16 %v2005, %v2002
        %v2117 = vpack.c.b16 %v2006, %v2003
        %v2118 = vpack.c.b16 %v2007, %v2004
        %v2119 = vpack.c.b16 %v2011, %v2008
        %v2120 = vpack.c.b16 %v2012, %v2009
        %v2121 = vpack.c.b16 %v2013, %v2010
        %v2122 = vpack.c.b16 %v2017, %v2014
        %v2123 = vpack.c.b16 %v2018, %v2015
        %v2124 = vpack.c.b16 %v2019, %v2016
        %v2125 = vpack.c.b16 %v2023, %v2020
        %v2126 = vpack.c.b16 %v2024, %v2021
        %v2127 = vpack.c.b16 %v2025, %v2022
        %v2128 = vpack.c.b16 %v2029, %v2026
        %v2129 = vpack.c.b16 %v2030, %v2027
        %v2130 = vpack.c.b16 %v2031, %v2028
        %v2131 = vpack.c.b16 %v2035, %v2032
        %v2132 = vpack.c.b16 %v2036, %v2033
        %v2133 = vpack.c.b16 %v2037, %v2034
        %v2134 = vpack.c.b16 %v2041, %v2038
        %v2135 = vpack.c.b16 %v2042, %v2039
        %v2136 = vpack.c.b16 %v2043, %v2040
        %v2137 = vpack.c.b16 %v2047, %v2044
        %v2138 = vpack.c.b16 %v2048, %v2045
        %v2139 = vpack.c.b16 %v2049, %v2046
        %v2140 = vpack.c.b16 %v2053, %v2050
        %v2141 = vpack.c.b16 %v2054, %v2051
        %v2142 = vpack.c.b16 %v2055, %v2052
        %v2143 = vpack.c.b16 %v2059, %v2056
        %v2144 = vpack.c.b16 %v2060, %v2057
        %v2145 = vpack.c.b16 %v2061, %v2058
        %v2146 = vpack.c.b16 %v2065, %v2062
        %v2147 = vpack.c.b16 %v2066, %v2063
        %v2148 = vpack.c.b16 %v2067, %v2064
        %v2149 = vpack.c.b16 %v2071, %v2068
        %v2150 = vpack.c.b16 %v2072, %v2069
        %v2151 = vpack.c.b16 %v2073, %v2070
        %v2152 = vpack.c.b16 %v2077, %v2074
        %v2153 = vpack.c.b16 %v2078, %v2075
        %v2154 = vpack.c.b16 %v2079, %v2076
        %v2155 = vpack.c.b16 %v2083, %v2080
        %v2156 = vpack.c.b16 %v2084, %v2081
        %v2157 = vpack.c.b16 %v2085, %v2082
        %2230 = vmatpush.bf16.msra.mxu0 %v2107
        %2231 = vmatpush.bf16.msra.mxu0 %v2104
        %2232 = vmatpush.bf16.msra.mxu0 %v2101
        %2233 = vmatpush.bf16.msra.mxu0 %v2098
        %2234 = vmatpush.bf16.msra.mxu0 %v2095
        %2235 = vmatpush.bf16.msra.mxu0 %v2092
        %2236 = vmatpush.bf16.msra.mxu0 %v2089
        %2237 = vmatpush.bf16.msra.mxu0 %v2086
        %2238 = vmatmul.bf16.gmra.mxu0 %v1712
        %v2239 = vpop.f32.mrf.mxu0
        %v2240 = vadd.f32 %v1840, %v2239
        %v2241 = vpop.f32.mrf.mxu0
        %v2242 = vadd.f32 %v1840, %v2241
        %2243 = vmatmul.bf16.gmra.mxu0 %v1715
        %v2244 = vpop.f32.mrf.mxu0
        %v2245 = vadd.f32 %v1840, %v2244
        %v2246 = vpop.f32.mrf.mxu0
        %v2247 = vadd.f32 %v1840, %v2246
        %2248 = vmatmul.bf16.gmra.mxu0 %v1718
        %v2249 = vpop.f32.mrf.mxu0
        %v2250 = vadd.f32 %v1840, %v2249
        %v2251 = vpop.f32.mrf.mxu0
        %v2252 = vadd.f32 %v1840, %v2251
        %2253 = vmatmul.bf16.gmra.mxu0 %v1721
        %v2254 = vpop.f32.mrf.mxu0
        %v2255 = vadd.f32 %v1840, %v2254
        %v2256 = vpop.f32.mrf.mxu0
        %v2257 = vadd.f32 %v1840, %v2256
        %2258 = vmatmul.bf16.gmra.mxu0 %v1724
        %v2259 = vpop.f32.mrf.mxu0
        %v2260 = vadd.f32 %v1840, %v2259
        %v2261 = vpop.f32.mrf.mxu0
        %v2262 = vadd.f32 %v1840, %v2261
        %2263 = vmatmul.bf16.gmra.mxu0 %v1727
        %v2264 = vpop.f32.mrf.mxu0
        %v2265 = vadd.f32 %v1840, %v2264
        %v2266 = vpop.f32.mrf.mxu0
        %v2267 = vadd.f32 %v1840, %v2266
        %2268 = vmatmul.bf16.gmra.mxu0 %v1730
        %v2269 = vpop.f32.mrf.mxu0
        %v2270 = vadd.f32 %v1840, %v2269
        %v2271 = vpop.f32.mrf.mxu0
        %v2272 = vadd.f32 %v1840, %v2271
        %2273 = vmatmul.bf16.gmra.mxu0 %v1733
        %v2274 = vpop.f32.mrf.mxu0
        %v2275 = vadd.f32 %v1840, %v2274
        %v2276 = vpop.f32.mrf.mxu0
        %v2277 = vadd.f32 %v1840, %v2276
        %2278 = vmatmul.bf16.gmra.mxu0 %v1736
        %v2279 = vpop.f32.mrf.mxu0
        %v2280 = vadd.f32 %v1840, %v2279
        %v2281 = vpop.f32.mrf.mxu0
        %v2282 = vadd.f32 %v1840, %v2281
        %2283 = vmatmul.bf16.gmra.mxu0 %v1739
        %v2284 = vpop.f32.mrf.mxu0
        %v2285 = vadd.f32 %v1840, %v2284
        %v2286 = vpop.f32.mrf.mxu0
        %2287 = vdwg.mxu0
        %2288 = vmatpush.bf16.msra.mxu0 %v2131
        %2289 = vmatpush.bf16.msra.mxu0 %v2128
        %2290 = vmatpush.bf16.msra.mxu0 %v2125
        %2291 = vmatpush.bf16.msra.mxu0 %v2122
        %2292 = vmatpush.bf16.msra.mxu0 %v2119
        %2293 = vmatpush.bf16.msra.mxu0 %v2116
        %2294 = vmatpush.bf16.msra.mxu0 %v2113
        %2295 = vmatpush.bf16.msra.mxu0 %v2110
        %2296 = vmatmul.bf16.gmra.mxu0 %v1713
        %v2297 = vpop.f32.mrf.mxu0
        %v2298 = vadd.f32 %v2240, %v2297
        %v2299 = vpop.f32.mrf.mxu0
        %v2300 = vadd.f32 %v2242, %v2299
        %2301 = vmatmul.bf16.gmra.mxu0 %v1716
        %v2302 = vpop.f32.mrf.mxu0
        %v2303 = vadd.f32 %v2245, %v2302
        %v2304 = vpop.f32.mrf.mxu0
        %v2305 = vadd.f32 %v2247, %v2304
        %2306 = vmatmul.bf16.gmra.mxu0 %v1719
        %v2307 = vpop.f32.mrf.mxu0
        %v2308 = vadd.f32 %v2250, %v2307
        %v2309 = vpop.f32.mrf.mxu0
        %v2310 = vadd.f32 %v2252, %v2309
        %2311 = vmatmul.bf16.gmra.mxu0 %v1722
        %v2312 = vpop.f32.mrf.mxu0
        %v2313 = vadd.f32 %v2255, %v2312
        %v2314 = vpop.f32.mrf.mxu0
        %v2315 = vadd.f32 %v2257, %v2314
        %2316 = vmatmul.bf16.gmra.mxu0 %v1725
        %v2317 = vpop.f32.mrf.mxu0
        %v2318 = vadd.f32 %v2260, %v2317
        %v2319 = vpop.f32.mrf.mxu0
        %v2320 = vadd.f32 %v2262, %v2319
        %2321 = vmatmul.bf16.gmra.mxu0 %v1728
        %v2322 = vpop.f32.mrf.mxu0
        %v2323 = vadd.f32 %v2265, %v2322
        %v2324 = vpop.f32.mrf.mxu0
        %v2325 = vadd.f32 %v2267, %v2324
        %2326 = vmatmul.bf16.gmra.mxu0 %v1731
        %v2327 = vpop.f32.mrf.mxu0
        %v2328 = vadd.f32 %v2270, %v2327
        %v2329 = vpop.f32.mrf.mxu0
        %v2330 = vadd.f32 %v2272, %v2329
        %2331 = vmatmul.bf16.gmra.mxu0 %v1734
        %v2332 = vpop.f32.mrf.mxu0
        %v2333 = vadd.f32 %v2275, %v2332
        %v2334 = vpop.f32.mrf.mxu0
        %v2335 = vadd.f32 %v2277, %v2334
        %2336 = vmatmul.bf16.gmra.mxu0 %v1737
        %v2337 = vpop.f32.mrf.mxu0
        %v2338 = vadd.f32 %v2280, %v2337
        %v2339 = vpop.f32.mrf.mxu0
        %v2340 = vadd.f32 %v2282, %v2339
        %2341 = vmatmul.bf16.gmra.mxu0 %v1740
        %v2342 = vpop.f32.mrf.mxu0
        %v2343 = vadd.f32 %v2285, %v2342
        %v2344 = vpop.f32.mrf.mxu0
        %2345 = vdwg.mxu0
        %2346 = vmatpush.bf16.msra.mxu0 %v2155
        %2347 = vmatpush.bf16.msra.mxu0 %v2152
        %2348 = vmatpush.bf16.msra.mxu0 %v2149
        %2349 = vmatpush.bf16.msra.mxu0 %v2146
        %2350 = vmatpush.bf16.msra.mxu0 %v2143
        %2351 = vmatpush.bf16.msra.mxu0 %v2140
        %2352 = vmatpush.bf16.msra.mxu0 %v2137
        %2353 = vmatpush.bf16.msra.mxu0 %v2134
        %2354 = vmatmul.bf16.gmra.mxu0 %v1714
        %v2355 = vpop.f32.mrf.mxu0
        %v2356 = vadd.f32 %v2298, %v2355
        %v2357 = vpop.f32.mrf.mxu0
        %v2358 = vadd.f32 %v2300, %v2357
        %2359 = vmatmul.bf16.gmra.mxu0 %v1717
        %v2360 = vpop.f32.mrf.mxu0
        %v2361 = vadd.f32 %v2303, %v2360
        %v2362 = vpop.f32.mrf.mxu0
        %v2363 = vadd.f32 %v2305, %v2362
        %2364 = vmatmul.bf16.gmra.mxu0 %v1720
        %v2365 = vpop.f32.mrf.mxu0
        %v2366 = vadd.f32 %v2308, %v2365
        %v2367 = vpop.f32.mrf.mxu0
        %v2368 = vadd.f32 %v2310, %v2367
        %2369 = vmatmul.bf16.gmra.mxu0 %v1723
        %v2370 = vpop.f32.mrf.mxu0
        %v2371 = vadd.f32 %v2313, %v2370
        %v2372 = vpop.f32.mrf.mxu0
        %v2373 = vadd.f32 %v2315, %v2372
        %2374 = vmatmul.bf16.gmra.mxu0 %v1726
        %v2375 = vpop.f32.mrf.mxu0
        %v2376 = vadd.f32 %v2318, %v2375
        %v2377 = vpop.f32.mrf.mxu0
        %v2378 = vadd.f32 %v2320, %v2377
        %2379 = vmatmul.bf16.gmra.mxu0 %v1729
        %v2380 = vpop.f32.mrf.mxu0
        %v2381 = vadd.f32 %v2323, %v2380
        %v2382 = vpop.f32.mrf.mxu0
        %v2383 = vadd.f32 %v2325, %v2382
        %2384 = vmatmul.bf16.gmra.mxu0 %v1732
        %v2385 = vpop.f32.mrf.mxu0
        %v2386 = vadd.f32 %v2328, %v2385
        %v2387 = vpop.f32.mrf.mxu0
        %v2388 = vadd.f32 %v2330, %v2387
        %2389 = vmatmul.bf16.gmra.mxu0 %v1735
        %v2390 = vpop.f32.mrf.mxu0
        %v2391 = vadd.f32 %v2333, %v2390
        %v2392 = vpop.f32.mrf.mxu0
        %v2393 = vadd.f32 %v2335, %v2392
        %2394 = vmatmul.bf16.gmra.mxu0 %v1738
        %v2395 = vpop.f32.mrf.mxu0
        %v2396 = vadd.f32 %v2338, %v2395
        %v2397 = vpop.f32.mrf.mxu0
        %v2398 = vadd.f32 %v2340, %v2397
        %2399 = vmatmul.bf16.gmra.mxu0 %v1741
        %v2400 = vpop.f32.mrf.mxu0
        %v2401 = vadd.f32 %v2343, %v2400
        %v2402 = vpop.f32.mrf.mxu0
        %2403 = vdwg.mxu0
        %2404 = vmatpush.bf16.msra.mxu0 %v2108
        %2405 = vmatpush.bf16.msra.mxu0 %v2105
        %2406 = vmatpush.bf16.msra.mxu0 %v2102
        %2407 = vmatpush.bf16.msra.mxu0 %v2099
        %2408 = vmatpush.bf16.msra.mxu0 %v2096
        %2409 = vmatpush.bf16.msra.mxu0 %v2093
        %2410 = vmatpush.bf16.msra.mxu0 %v2090
        %2411 = vmatpush.bf16.msra.mxu0 %v2087
        %2412 = vmatmul.bf16.gmra.mxu0 %v1712
        %v2413 = vpop.f32.mrf.mxu0
        %v2414 = vadd.f32 %v1841, %v2413
        %v2415 = vpop.f32.mrf.mxu0
        %v2416 = vadd.f32 %v1841, %v2415
        %2417 = vmatmul.bf16.gmra.mxu0 %v1715
        %v2418 = vpop.f32.mrf.mxu0
        %v2419 = vadd.f32 %v1841, %v2418
        %v2420 = vpop.f32.mrf.mxu0
        %v2421 = vadd.f32 %v1841, %v2420
        %2422 = vmatmul.bf16.gmra.mxu0 %v1718
        %v2423 = vpop.f32.mrf.mxu0
        %v2424 = vadd.f32 %v1841, %v2423
        %v2425 = vpop.f32.mrf.mxu0
        %v2426 = vadd.f32 %v1841, %v2425
        %2427 = vmatmul.bf16.gmra.mxu0 %v1721
        %v2428 = vpop.f32.mrf.mxu0
        %v2429 = vadd.f32 %v1841, %v2428
        %v2430 = vpop.f32.mrf.mxu0
        %v2431 = vadd.f32 %v1841, %v2430
        %2432 = vmatmul.bf16.gmra.mxu0 %v1724
        %v2433 = vpop.f32.mrf.mxu0
        %v2434 = vadd.f32 %v1841, %v2433
        %v2435 = vpop.f32.mrf.mxu0
        %v2436 = vadd.f32 %v1841, %v2435
        %2437 = vmatmul.bf16.gmra.mxu0 %v1727
        %v2438 = vpop.f32.mrf.mxu0
        %v2439 = vadd.f32 %v1841, %v2438
        %v2440 = vpop.f32.mrf.mxu0
        %v2441 = vadd.f32 %v1841, %v2440
        %2442 = vmatmul.bf16.gmra.mxu0 %v1730
        %v2443 = vpop.f32.mrf.mxu0
        %v2444 = vadd.f32 %v1841, %v2443
        %v2445 = vpop.f32.mrf.mxu0
        %v2446 = vadd.f32 %v1841, %v2445
        %2447 = vmatmul.bf16.gmra.mxu0 %v1733
        %v2448 = vpop.f32.mrf.mxu0
        %v2449 = vadd.f32 %v1841, %v2448
        %v2450 = vpop.f32.mrf.mxu0
        %v2451 = vadd.f32 %v1841, %v2450
        %2452 = vmatmul.bf16.gmra.mxu0 %v1736
        %v2453 = vpop.f32.mrf.mxu0
        %v2454 = vadd.f32 %v1841, %v2453
        %v2455 = vpop.f32.mrf.mxu0
        %v2456 = vadd.f32 %v1841, %v2455
        %2457 = vmatmul.bf16.gmra.mxu0 %v1739
        %v2458 = vpop.f32.mrf.mxu0
        %v2459 = vadd.f32 %v1841, %v2458
        %v2460 = vpop.f32.mrf.mxu0
        %2461 = vdwg.mxu0
        %2462 = vmatpush.bf16.msra.mxu0 %v2132
        %2463 = vmatpush.bf16.msra.mxu0 %v2129
        %2464 = vmatpush.bf16.msra.mxu0 %v2126
        %2465 = vmatpush.bf16.msra.mxu0 %v2123
        %2466 = vmatpush.bf16.msra.mxu0 %v2120
        %2467 = vmatpush.bf16.msra.mxu0 %v2117
        %2468 = vmatpush.bf16.msra.mxu0 %v2114
        %2469 = vmatpush.bf16.msra.mxu0 %v2111
        %2470 = vmatmul.bf16.gmra.mxu0 %v1713
        %v2471 = vpop.f32.mrf.mxu0
        %v2472 = vadd.f32 %v2414, %v2471
        %v2473 = vpop.f32.mrf.mxu0
        %v2474 = vadd.f32 %v2416, %v2473
        %2475 = vmatmul.bf16.gmra.mxu0 %v1716
        %v2476 = vpop.f32.mrf.mxu0
        %v2477 = vadd.f32 %v2419, %v2476
        %v2478 = vpop.f32.mrf.mxu0
        %v2479 = vadd.f32 %v2421, %v2478
        %2480 = vmatmul.bf16.gmra.mxu0 %v1719
        %v2481 = vpop.f32.mrf.mxu0
        %v2482 = vadd.f32 %v2424, %v2481
        %v2483 = vpop.f32.mrf.mxu0
        %v2484 = vadd.f32 %v2426, %v2483
        %2485 = vmatmul.bf16.gmra.mxu0 %v1722
        %v2486 = vpop.f32.mrf.mxu0
        %v2487 = vadd.f32 %v2429, %v2486
        %v2488 = vpop.f32.mrf.mxu0
        %v2489 = vadd.f32 %v2431, %v2488
        %2490 = vmatmul.bf16.gmra.mxu0 %v1725
        %v2491 = vpop.f32.mrf.mxu0
        %v2492 = vadd.f32 %v2434, %v2491
        %v2493 = vpop.f32.mrf.mxu0
        %v2494 = vadd.f32 %v2436, %v2493
        %2495 = vmatmul.bf16.gmra.mxu0 %v1728
        %v2496 = vpop.f32.mrf.mxu0
        %v2497 = vadd.f32 %v2439, %v2496
        %v2498 = vpop.f32.mrf.mxu0
        %v2499 = vadd.f32 %v2441, %v2498
        %2500 = vmatmul.bf16.gmra.mxu0 %v1731
        %v2501 = vpop.f32.mrf.mxu0
        %v2502 = vadd.f32 %v2444, %v2501
        %v2503 = vpop.f32.mrf.mxu0
        %v2504 = vadd.f32 %v2446, %v2503
        %2505 = vmatmul.bf16.gmra.mxu0 %v1734
        %v2506 = vpop.f32.mrf.mxu0
        %v2507 = vadd.f32 %v2449, %v2506
        %v2508 = vpop.f32.mrf.mxu0
        %v2509 = vadd.f32 %v2451, %v2508
        %2510 = vmatmul.bf16.gmra.mxu0 %v1737
        %v2511 = vpop.f32.mrf.mxu0
        %v2512 = vadd.f32 %v2454, %v2511
        %v2513 = vpop.f32.mrf.mxu0
        %v2514 = vadd.f32 %v2456, %v2513
        %2515 = vmatmul.bf16.gmra.mxu0 %v1740
        %v2516 = vpop.f32.mrf.mxu0
        %v2517 = vadd.f32 %v2459, %v2516
        %v2518 = vpop.f32.mrf.mxu0
        %2519 = vdwg.mxu0
        %2520 = vmatpush.bf16.msra.mxu0 %v2156
        %2521 = vmatpush.bf16.msra.mxu0 %v2153
        %2522 = vmatpush.bf16.msra.mxu0 %v2150
        %2523 = vmatpush.bf16.msra.mxu0 %v2147
        %2524 = vmatpush.bf16.msra.mxu0 %v2144
        %2525 = vmatpush.bf16.msra.mxu0 %v2141
        %2526 = vmatpush.bf16.msra.mxu0 %v2138
        %2527 = vmatpush.bf16.msra.mxu0 %v2135
        %2528 = vmatmul.bf16.gmra.mxu0 %v1714
        %v2529 = vpop.f32.mrf.mxu0
        %v2530 = vadd.f32 %v2472, %v2529
        %v2531 = vpop.f32.mrf.mxu0
        %v2532 = vadd.f32 %v2474, %v2531
        %2533 = vmatmul.bf16.gmra.mxu0 %v1717
        %v2534 = vpop.f32.mrf.mxu0
        %v2535 = vadd.f32 %v2477, %v2534
        %v2536 = vpop.f32.mrf.mxu0
        %v2537 = vadd.f32 %v2479, %v2536
        %2538 = vmatmul.bf16.gmra.mxu0 %v1720
        %v2539 = vpop.f32.mrf.mxu0
        %v2540 = vadd.f32 %v2482, %v2539
        %v2541 = vpop.f32.mrf.mxu0
        %v2542 = vadd.f32 %v2484, %v2541
        %2543 = vmatmul.bf16.gmra.mxu0 %v1723
        %v2544 = vpop.f32.mrf.mxu0
        %v2545 = vadd.f32 %v2487, %v2544
        %v2546 = vpop.f32.mrf.mxu0
        %v2547 = vadd.f32 %v2489, %v2546
        %2548 = vmatmul.bf16.gmra.mxu0 %v1726
        %v2549 = vpop.f32.mrf.mxu0
        %v2550 = vadd.f32 %v2492, %v2549
        %v2551 = vpop.f32.mrf.mxu0
        %v2552 = vadd.f32 %v2494, %v2551
        %2553 = vmatmul.bf16.gmra.mxu0 %v1729
        %v2554 = vpop.f32.mrf.mxu0
        %v2555 = vadd.f32 %v2497, %v2554
        %v2556 = vpop.f32.mrf.mxu0
        %v2557 = vadd.f32 %v2499, %v2556
        %2558 = vmatmul.bf16.gmra.mxu0 %v1732
        %v2559 = vpop.f32.mrf.mxu0
        %v2560 = vadd.f32 %v2502, %v2559
        %v2561 = vpop.f32.mrf.mxu0
        %v2562 = vadd.f32 %v2504, %v2561
        %2563 = vmatmul.bf16.gmra.mxu0 %v1735
        %v2564 = vpop.f32.mrf.mxu0
        %v2565 = vadd.f32 %v2507, %v2564
        %v2566 = vpop.f32.mrf.mxu0
        %v2567 = vadd.f32 %v2509, %v2566
        %2568 = vmatmul.bf16.gmra.mxu0 %v1738
        %v2569 = vpop.f32.mrf.mxu0
        %v2570 = vadd.f32 %v2512, %v2569
        %v2571 = vpop.f32.mrf.mxu0
        %v2572 = vadd.f32 %v2514, %v2571
        %2573 = vmatmul.bf16.gmra.mxu0 %v1741
        %v2574 = vpop.f32.mrf.mxu0
        %v2575 = vadd.f32 %v2517, %v2574
        %v2576 = vpop.f32.mrf.mxu0
        %2577 = vdwg.mxu0
        %2578 = vmatpush.bf16.msra.mxu0 %v2109
        %2579 = vmatpush.bf16.msra.mxu0 %v2106
        %2580 = vmatpush.bf16.msra.mxu0 %v2103
        %2581 = vmatpush.bf16.msra.mxu0 %v2100
        %2582 = vmatpush.bf16.msra.mxu0 %v2097
        %2583 = vmatpush.bf16.msra.mxu0 %v2094
        %2584 = vmatpush.bf16.msra.mxu0 %v2091
        %2585 = vmatpush.bf16.msra.mxu0 %v2088
        %2586 = vmatmul.bf16.gmra.mxu0 %v1712
        %v2587 = vpop.f32.mrf.mxu0
        %v2588 = vadd.f32 %v1842, %v2587
        %v2589 = vpop.f32.mrf.mxu0
        %v2590 = vadd.f32 %v1842, %v2589
        %2591 = vmatmul.bf16.gmra.mxu0 %v1715
        %v2592 = vpop.f32.mrf.mxu0
        %v2593 = vadd.f32 %v1842, %v2592
        %v2594 = vpop.f32.mrf.mxu0
        %v2595 = vadd.f32 %v1842, %v2594
        %2596 = vmatmul.bf16.gmra.mxu0 %v1718
        %v2597 = vpop.f32.mrf.mxu0
        %v2598 = vadd.f32 %v1842, %v2597
        %v2599 = vpop.f32.mrf.mxu0
        %v2600 = vadd.f32 %v1842, %v2599
        %2601 = vmatmul.bf16.gmra.mxu0 %v1721
        %v2602 = vpop.f32.mrf.mxu0
        %v2603 = vadd.f32 %v1842, %v2602
        %v2604 = vpop.f32.mrf.mxu0
        %v2605 = vadd.f32 %v1842, %v2604
        %2606 = vmatmul.bf16.gmra.mxu0 %v1724
        %v2607 = vpop.f32.mrf.mxu0
        %v2608 = vadd.f32 %v1842, %v2607
        %v2609 = vpop.f32.mrf.mxu0
        %v2610 = vadd.f32 %v1842, %v2609
        %2611 = vmatmul.bf16.gmra.mxu0 %v1727
        %v2612 = vpop.f32.mrf.mxu0
        %v2613 = vadd.f32 %v1842, %v2612
        %v2614 = vpop.f32.mrf.mxu0
        %v2615 = vadd.f32 %v1842, %v2614
        %2616 = vmatmul.bf16.gmra.mxu0 %v1730
        %v2617 = vpop.f32.mrf.mxu0
        %v2618 = vadd.f32 %v1842, %v2617
        %v2619 = vpop.f32.mrf.mxu0
        %v2620 = vadd.f32 %v1842, %v2619
        %2621 = vmatmul.bf16.gmra.mxu0 %v1733
        %v2622 = vpop.f32.mrf.mxu0
        %v2623 = vadd.f32 %v1842, %v2622
        %v2624 = vpop.f32.mrf.mxu0
        %v2625 = vadd.f32 %v1842, %v2624
        %2626 = vmatmul.bf16.gmra.mxu0 %v1736
        %v2627 = vpop.f32.mrf.mxu0
        %v2628 = vadd.f32 %v1842, %v2627
        %v2629 = vpop.f32.mrf.mxu0
        %v2630 = vadd.f32 %v1842, %v2629
        %2631 = vmatmul.bf16.gmra.mxu0 %v1739
        %v2632 = vpop.f32.mrf.mxu0
        %v2633 = vadd.f32 %v1842, %v2632
        %v2634 = vpop.f32.mrf.mxu0
        %2635 = vdwg.mxu0
        %2636 = vmatpush.bf16.msra.mxu0 %v2133
        %2637 = vmatpush.bf16.msra.mxu0 %v2130
        %2638 = vmatpush.bf16.msra.mxu0 %v2127
        %2639 = vmatpush.bf16.msra.mxu0 %v2124
        %2640 = vmatpush.bf16.msra.mxu0 %v2121
        %2641 = vmatpush.bf16.msra.mxu0 %v2118
        %2642 = vmatpush.bf16.msra.mxu0 %v2115
        %2643 = vmatpush.bf16.msra.mxu0 %v2112
        %2644 = vmatmul.bf16.gmra.mxu0 %v1713
        %v2645 = vpop.f32.mrf.mxu0
        %v2646 = vadd.f32 %v2588, %v2645
        %v2647 = vpop.f32.mrf.mxu0
        %v2648 = vadd.f32 %v2590, %v2647
        %2649 = vmatmul.bf16.gmra.mxu0 %v1716
        %v2650 = vpop.f32.mrf.mxu0
        %v2651 = vadd.f32 %v2593, %v2650
        %v2652 = vpop.f32.mrf.mxu0
        %v2653 = vadd.f32 %v2595, %v2652
        %2654 = vmatmul.bf16.gmra.mxu0 %v1719
        %v2655 = vpop.f32.mrf.mxu0
        %v2656 = vadd.f32 %v2598, %v2655
        %v2657 = vpop.f32.mrf.mxu0
        %v2658 = vadd.f32 %v2600, %v2657
        %2659 = vmatmul.bf16.gmra.mxu0 %v1722
        %v2660 = vpop.f32.mrf.mxu0
        %v2661 = vadd.f32 %v2603, %v2660
        %v2662 = vpop.f32.mrf.mxu0
        %v2663 = vadd.f32 %v2605, %v2662
        %2664 = vmatmul.bf16.gmra.mxu0 %v1725
        %v2665 = vpop.f32.mrf.mxu0
        %v2666 = vadd.f32 %v2608, %v2665
        %v2667 = vpop.f32.mrf.mxu0
        %v2668 = vadd.f32 %v2610, %v2667
        %2669 = vmatmul.bf16.gmra.mxu0 %v1728
        %v2670 = vpop.f32.mrf.mxu0
        %v2671 = vadd.f32 %v2613, %v2670
        %v2672 = vpop.f32.mrf.mxu0
        %v2673 = vadd.f32 %v2615, %v2672
        %2674 = vmatmul.bf16.gmra.mxu0 %v1731
        %v2675 = vpop.f32.mrf.mxu0
        %v2676 = vadd.f32 %v2618, %v2675
        %v2677 = vpop.f32.mrf.mxu0
        %v2678 = vadd.f32 %v2620, %v2677
        %2679 = vmatmul.bf16.gmra.mxu0 %v1734
        %v2680 = vpop.f32.mrf.mxu0
        %v2681 = vadd.f32 %v2623, %v2680
        %v2682 = vpop.f32.mrf.mxu0
        %v2683 = vadd.f32 %v2625, %v2682
        %2684 = vmatmul.bf16.gmra.mxu0 %v1737
        %v2685 = vpop.f32.mrf.mxu0
        %v2686 = vadd.f32 %v2628, %v2685
        %v2687 = vpop.f32.mrf.mxu0
        %v2688 = vadd.f32 %v2630, %v2687
        %2689 = vmatmul.bf16.gmra.mxu0 %v1740
        %v2690 = vpop.f32.mrf.mxu0
        %v2691 = vadd.f32 %v2633, %v2690
        %v2692 = vpop.f32.mrf.mxu0
        %2693 = vdwg.mxu0
        %2694 = vmatpush.bf16.msra.mxu0 %v2157
        %2695 = vmatpush.bf16.msra.mxu0 %v2154
        %2696 = vmatpush.bf16.msra.mxu0 %v2151
        %2697 = vmatpush.bf16.msra.mxu0 %v2148
        %2698 = vmatpush.bf16.msra.mxu0 %v2145
        %2699 = vmatpush.bf16.msra.mxu0 %v2142
        %2700 = vmatpush.bf16.msra.mxu0 %v2139
        %2701 = vmatpush.bf16.msra.mxu0 %v2136
        %2702 = vmatmul.bf16.gmra.mxu0 %v1714
        %v2703 = vpop.f32.mrf.mxu0
        %v2704 = vadd.f32 %v2646, %v2703
        %v2705 = vpop.f32.mrf.mxu0
        %v2706 = vadd.f32 %v2648, %v2705
        %2707 = vmatmul.bf16.gmra.mxu0 %v1717
        %v2708 = vpop.f32.mrf.mxu0
        %v2709 = vadd.f32 %v2651, %v2708
        %v2710 = vpop.f32.mrf.mxu0
        %v2711 = vadd.f32 %v2653, %v2710
        %2712 = vmatmul.bf16.gmra.mxu0 %v1720
        %v2713 = vpop.f32.mrf.mxu0
        %v2714 = vadd.f32 %v2656, %v2713
        %v2715 = vpop.f32.mrf.mxu0
        %v2716 = vadd.f32 %v2658, %v2715
        %2717 = vmatmul.bf16.gmra.mxu0 %v1723
        %v2718 = vpop.f32.mrf.mxu0
        %v2719 = vadd.f32 %v2661, %v2718
        %v2720 = vpop.f32.mrf.mxu0
        %v2721 = vadd.f32 %v2663, %v2720
        %2722 = vmatmul.bf16.gmra.mxu0 %v1726
        %v2723 = vpop.f32.mrf.mxu0
        %v2724 = vadd.f32 %v2666, %v2723
        %v2725 = vpop.f32.mrf.mxu0
        %v2726 = vadd.f32 %v2668, %v2725
        %2727 = vmatmul.bf16.gmra.mxu0 %v1729
        %v2728 = vpop.f32.mrf.mxu0
        %v2729 = vadd.f32 %v2671, %v2728
        %v2730 = vpop.f32.mrf.mxu0
        %v2731 = vadd.f32 %v2673, %v2730
        %2732 = vmatmul.bf16.gmra.mxu0 %v1732
        %v2733 = vpop.f32.mrf.mxu0
        %v2734 = vadd.f32 %v2676, %v2733
        %v2735 = vpop.f32.mrf.mxu0
        %v2736 = vadd.f32 %v2678, %v2735
        %2737 = vmatmul.bf16.gmra.mxu0 %v1735
        %v2738 = vpop.f32.mrf.mxu0
        %v2739 = vadd.f32 %v2681, %v2738
        %v2740 = vpop.f32.mrf.mxu0
        %v2741 = vadd.f32 %v2683, %v2740
        %2742 = vmatmul.bf16.gmra.mxu0 %v1738
        %v2743 = vpop.f32.mrf.mxu0
        %v2744 = vadd.f32 %v2686, %v2743
        %v2745 = vpop.f32.mrf.mxu0
        %v2746 = vadd.f32 %v2688, %v2745
        %2747 = vmatmul.bf16.gmra.mxu0 %v1741
        %v2748 = vpop.f32.mrf.mxu0
        %v2749 = vadd.f32 %v2691, %v2748
        %v2750 = vpop.f32.mrf.mxu0
        %2751 = vdwg.mxu0
        %v2752 = vpack.c.bf16 %v2530, %v2356
        %v2753 = vpack.c.bf16 %v2704, %v2704
        %v2754 = vpack.c.bf16 %v2532, %v2358
        %v2755 = vpack.c.bf16 %v2706, %v2706
        %v2756 = vpack.c.bf16 %v2535, %v2361
        %v2757 = vpack.c.bf16 %v2709, %v2709
        %v2758 = vpack.c.bf16 %v2537, %v2363
        %v2759 = vpack.c.bf16 %v2711, %v2711
        %v2760 = vpack.c.bf16 %v2540, %v2366
        %v2761 = vpack.c.bf16 %v2714, %v2714
        %v2762 = vpack.c.bf16 %v2542, %v2368
        %v2763 = vpack.c.bf16 %v2716, %v2716
        %v2764 = vpack.c.bf16 %v2545, %v2371
        %v2765 = vpack.c.bf16 %v2719, %v2719
        %v2766 = vpack.c.bf16 %v2547, %v2373
        %v2767 = vpack.c.bf16 %v2721, %v2721
        %v2768 = vpack.c.bf16 %v2550, %v2376
        %v2769 = vpack.c.bf16 %v2724, %v2724
        %v2770 = vpack.c.bf16 %v2552, %v2378
        %v2771 = vpack.c.bf16 %v2726, %v2726
        %v2772 = vpack.c.bf16 %v2555, %v2381
        %v2773 = vpack.c.bf16 %v2729, %v2729
        %v2774 = vpack.c.bf16 %v2557, %v2383
        %v2775 = vpack.c.bf16 %v2731, %v2731
        %v2776 = vpack.c.bf16 %v2560, %v2386
        %v2777 = vpack.c.bf16 %v2734, %v2734
        %v2778 = vpack.c.bf16 %v2562, %v2388
        %v2779 = vpack.c.bf16 %v2736, %v2736
        %v2780 = vpack.c.bf16 %v2565, %v2391
        %v2781 = vpack.c.bf16 %v2739, %v2739
        %v2782 = vpack.c.bf16 %v2567, %v2393
        %v2783 = vpack.c.bf16 %v2741, %v2741
        %v2784 = vpack.c.bf16 %v2570, %v2396
        %v2785 = vpack.c.bf16 %v2744, %v2744
        %v2786 = vpack.c.bf16 %v2572, %v2398
        %v2787 = vpack.c.bf16 %v2746, %v2746
        %v2788 = vpack.c.bf16 %v2575, %v2401
        %v2789 = vpack.c.bf16 %v2749, %v2749
        %2790 = vst [vmem:[%s306] sm:$0xff] %v2752
        %2791 = vst [vmem:[%s306 + $0x8] sm:$0xf] %v2753
        %2792 = vst [vmem:[%s306 + $0xc] sm:$0xff] %v2754
        %2793 = vst [vmem:[%s306 + $0x14] sm:$0xf] %v2755
        %2794 = vst [vmem:[%s306 + $0x18] sm:$0xff] %v2756
        %2795 = vst [vmem:[%s306 + $0x20] sm:$0xf] %v2757
        %2796 = vst [vmem:[%s306 + $0x24] sm:$0xff] %v2758
        %2797 = vst [vmem:[%s306 + $0x2c] sm:$0xf] %v2759
        %2798 = vst [vmem:[%s306 + $0x30] sm:$0xff] %v2760
        %2799 = vst [vmem:[%s306 + $0x38] sm:$0xf] %v2761
        %2800 = vst [vmem:[%s306 + $0x3c] sm:$0xff] %v2762
        %2801 = vst [vmem:[%s306 + $0x44] sm:$0xf] %v2763
        %2802 = vst [vmem:[%s306 + $0x48] sm:$0xff] %v2764
        %2803 = vst [vmem:[%s306 + $0x50] sm:$0xf] %v2765
        %2804 = vst [vmem:[%s306 + $0x54] sm:$0xff] %v2766
        %2805 = vst [vmem:[%s306 + $0x5c] sm:$0xf] %v2767
        %2806 = vst [vmem:[%s306 + $0x60] sm:$0xff] %v2768
        %2807 = vst [vmem:[%s306 + $0x68] sm:$0xf] %v2769
        %2808 = vst [vmem:[%s306 + $0x6c] sm:$0xff] %v2770
        %2809 = vst [vmem:[%s306 + $0x74] sm:$0xf] %v2771
        %2810 = vst [vmem:[%s306 + $0x78] sm:$0xff] %v2772
        %2811 = vst [vmem:[%s306 + $0x80] sm:$0xf] %v2773
        %2812 = vst [vmem:[%s306 + $0x84] sm:$0xff] %v2774
        %2813 = vst [vmem:[%s306 + $0x8c] sm:$0xf] %v2775
        %2814 = vst [vmem:[%s306 + $0x90] sm:$0xff] %v2776
        %2815 = vst [vmem:[%s306 + $0x98] sm:$0xf] %v2777
        %2816 = vst [vmem:[%s306 + $0x9c] sm:$0xff] %v2778
        %2817 = vst [vmem:[%s306 + $0xa4] sm:$0xf] %v2779
        %2818 = vst [vmem:[%s306 + $0xa8] sm:$0xff] %v2780
        %2819 = vst [vmem:[%s306 + $0xb0] sm:$0xf] %v2781
        %2820 = vst [vmem:[%s306 + $0xb4] sm:$0xff] %v2782
        %2821 = vst [vmem:[%s306 + $0xbc] sm:$0xf] %v2783
        %2822 = vst [vmem:[%s306 + $0xc0] sm:$0xff] %v2784
        %2823 = vst [vmem:[%s306 + $0xc8] sm:$0xf] %v2785
        %2824 = vst [vmem:[%s306 + $0xcc] sm:$0xff] %v2786
        %2825 = vst [vmem:[%s306 + $0xd4] sm:$0xf] %v2787
        %2826 = vst [vmem:[%s306 + $0xd8] sm:$0xff] %v2788
        %2827 = vst [vmem:[%s306 + $0xe0] sm:$0xf] %v2789
        %s2828 = sand.u32 %s183, 1
        %s2829 = scalar_lea.sflag [#allocation4], %s2828
        %s2830 = sand.u32 %s183, 1
        %s2831 = smul.addr %s2830, 228
        %s2832 = scalar_lea.vmem [#allocation7], %s2831
        // Predicated region
        $region57: #{tpu_custom_call.1} parent=47 // pred_check
          %p2833 = pneg %p193
        $region58: #{tpu_custom_call.1} parent=47 // pred_check_branch
          %2835 = sbr.rel (%p2833) target = $region60
        $region59: #{tpu_custom_call.1} parent=47 // pred_region
          %s2836 = smul.u32 19, %s23
          %2838 = vsyncadd %s2829, 0
          %s2839 = smul.addr %s2836, 3
          %s2840 = smul.addr %s2839, 4
          %s2841 = scalar_lea.hbm %s7, %s2840
          %s2842 = sshll.u32 %s2832, 4
          %s2843 = int_to_ptr.vmem [resolvable:$true] %s2842
          %s2844 = sshll.u32 %s2841, 4
          %s2845 = int_to_ptr.hbm [resolvable:$true] %s2844
          %2850 = dma.vmem_to_hbm [thread:$0]  %s2843, 3648, %s2845, %s2829, 192, 192, 12
        $region60: #{tpu_custom_call.1} parent=47 // pred_fallthru
          _
      $region48: #{tpu_custom_call.1} parent=5 // pred_fallthru
        _
      %p2851 = scmp.le.s32.totalorder 2, %s18
      // Predicated region
      $region61: #{tpu_custom_call.1} parent=5 // pred_check
        %p2852 = pneg %p2851
      $region62: #{tpu_custom_call.1} parent=5 // pred_check_branch
        %2854 = sbr.rel (%p2852) target = $region64
      $region63: #{tpu_custom_call.1} parent=5 // pred_region
        %s2855 = ssub.s32 %s18, 2
        // Predicated region
        $region65: #{tpu_custom_call.1} parent=63 // pred_check
          %p2856 = pneg %p199
        $region66: #{tpu_custom_call.1} parent=63 // pred_check_branch
          %2858 = sbr.rel (%p2856) target = $region68
        $region67: #{tpu_custom_call.1} parent=63 // pred_region
          %s2859 = sand.u32 %s184, 1
          %s2860 = scalar_lea.sflag [#allocation4], %s2859
          %s2861 = sand.u32 %s184, 1
          %s2862 = smul.addr %s2861, 228
          %s2863 = scalar_lea.vmem [#allocation7], %s2862
          %2865 = dma.done %s2860, 3648
        $region68: #{tpu_custom_call.1} parent=63 // pred_fallthru
          _
      $region64: #{tpu_custom_call.1} parent=5 // pred_fallthru
        _
    $region6: #{tpu_custom_call.1} parent=1 // loop_footer
      %s22 = sadd.s32 1, %s18
    $region7: #{tpu_custom_call.1} parent=1 // loop_footer_branch
      %17 = sbr.rel target = $region3
    $region8: #{tpu_custom_call.1} parent=1 // loop_exit
      _
    %2866 = vsyncpa [#allocation3], 1
    %s2867 = scalar_lea.sflag [#allocation3], 1
    %2868 = vsyncpa %s2867, 1
    %2869 = vsyncpa [#allocation6], 1
    %2870 = vsyncpa [#allocation4], 1
    %s2871 = scalar_lea.sflag [#allocation4], 1
    %2872 = vsyncpa %s2871, 1

</llo_original>
